<compile_context>
chip_gen: v5e
topology: v5e:2x2
jax: 0.10.0
libtpu: 0.0.40
codegen_flags: <defaults>
</compile_context>

<pallas_src>
import jax
import jax.numpy as jnp
from jax import lax
from jax.experimental import pallas as pl
from jax.experimental.pallas import tpu as pltpu

EPS = 1e-4  # matches l2normalize(v, eps=0.0001)


def _sn_linear_kernel(x_ref, w_ref, b_ref, u_ref, o_ref, sig_ref):
    # ---- power iteration: run once (grid step 0), carry 1/sigma in scratch ----
    @pl.when(pl.program_id(0) == 0)
    def _():
        w = w_ref[...]                                   # (Out, In), native dtype
        u = u_ref[...]                                   # (1, Out) row vector

        # v = l2normalize(W^T u)  ==  l2normalize(u @ W), kept as a (1, In) row.
        wt_u = lax.dot_general(u, w, (((1,), (0,)), ((), ())),
                               preferred_element_type=jnp.float32)
        ss_v = jnp.sum(wt_u * wt_u, keepdims=True)       # (1, 1)
        v = wt_u * (1.0 / (jnp.sqrt(ss_v) + EPS))

        # W v  ==  v @ W^T, kept as a (1, Out) row.
        wv = lax.dot_general(v.astype(w.dtype), w, (((1,), (1,)), ((), ())),
                             preferred_element_type=jnp.float32)
        ss_u = jnp.sum(wv * wv, keepdims=True)           # (1, 1)
        u_new = wv * (1.0 / (jnp.sqrt(ss_u) + EPS))

        sigma = jnp.sum(u_new * wv, keepdims=True)       # (1, 1)
        sig_ref[...] = 1.0 / sigma

    # ---- main matmul: y = (x @ W^T) * (1/sigma) + b ----
    y = lax.dot_general(x_ref[...], w_ref[...], (((1,), (1,)), ((), ())),
                        preferred_element_type=jnp.float32)   # (TB, Out)
    y = y * sig_ref[...] + b_ref[...].astype(jnp.float32)
    o_ref[...] = y.astype(o_ref.dtype)


def _round_up(n, m):
    return (n + m - 1) // m * m


def spectral_norm_linear(x, w, b, u, *, batch_tile=128):
    """Fused spectral-norm linear: y = x @ (W / sigma)^T + b.

    x: (B, In)   w: (Out, In)   b: (Out,) or (1, Out)   u: (Out,) or (1, Out)
    """
    B, In = x.shape
    Out, In_w = w.shape
    assert In_w == In

    # Lane-dense padding: last dims -> multiples of 128, batch tile -> multiple of 8.
    In_p = _round_up(In, 128)
    Out_p = _round_up(Out, 128)
    TB = min(batch_tile, _round_up(B, 8))
    B_p = _round_up(B, TB)

    x_p = jnp.zeros((B_p, In_p), x.dtype).at[:B, :In].set(x)
    w_p = jnp.zeros((Out_p, In_p), w.dtype).at[:Out, :In].set(w)
    b_p = jnp.zeros((1, Out_p), w.dtype).at[:, :Out].set(jnp.reshape(b, (1, Out)))
    u_p = jnp.zeros((1, Out_p), w.dtype).at[:, :Out].set(jnp.reshape(u, (1, Out)))

    y_p = pl.pallas_call(
        _sn_linear_kernel,
        out_shape=jax.ShapeDtypeStruct((B_p, Out_p), x.dtype),
        grid_spec=pltpu.PrefetchScalarGridSpec(
            num_scalar_prefetch=0,
            grid=(B_p // TB,),
            in_specs=[
                pl.BlockSpec((TB, In_p), lambda i: (i, 0)),      # x: tiled over batch
                pl.BlockSpec((Out_p, In_p), lambda i: (0, 0)),   # W: resident
                pl.BlockSpec((1, Out_p), lambda i: (0, 0)),      # bias: resident
                pl.BlockSpec((1, Out_p), lambda i: (0, 0)),      # u: resident
            ],
            out_specs=pl.BlockSpec((TB, Out_p), lambda i: (i, 0)),
            scratch_shapes=[pltpu.VMEM((1, 1), jnp.float32)],    # 1/sigma carry
        ),
        compiler_params=pltpu.CompilerParams(
            # sigma is computed at grid step 0 and reused -> keep axis sequential.
            dimension_semantics=("arbitrary",),
            vmem_limit_bytes=32 * 1024 * 1024,
        ),
    )(x_p, w_p, b_p, u_p)
    return y_p[:B, :Out]


def _reference(x, w, b, u):
    # Pure-JAX mirror of the PyTorch module's math.
    wt_u = w.T @ u
    v = wt_u / (jnp.linalg.norm(wt_u) + EPS)
    wv = w @ v
    u_new = wv / (jnp.linalg.norm(wv) + EPS)
    sigma = jnp.dot(u_new, wv)
    return x @ (w / sigma).T + jnp.reshape(b, (1, -1))


if __name__ == "__main__":
    key = jax.random.PRNGKey(0)
    k_x, k_w, k_b, k_u = jax.random.split(key, 4)

    # Generator128(debug=True): G_linear = SpectralNorm(nn.Linear(20, 4*4*16*8)).
    batch, in_features, out_features = 2, 20, 2048

    x = jax.random.normal(k_x, (batch, in_features), dtype=jnp.float32)
    w = jax.random.normal(k_w, (out_features, in_features), dtype=jnp.float32) * 0.05
    b = jax.random.normal(k_b, (out_features,), dtype=jnp.float32) * 0.01
    u0 = jax.random.normal(k_u, (out_features,), dtype=jnp.float32)
    u0 = u0 / (jnp.linalg.norm(u0) + EPS)  # u.data = l2normalize(u.data) in _make_params

    y = spectral_norm_linear(x, w, b, u0)
    jax.block_until_ready(y)
    assert y.shape == (batch, out_features)

    y_ref = _reference(x, w, b, u0)
    # Tolerance leaves headroom for f32-matmul precision-path differences
    # between the Mosaic kernel and XLA's reference dot on the MXU.
    assert jnp.allclose(y, y_ref, atol=1e-3, rtol=1e-2), float(
        jnp.max(jnp.abs(y - y_ref)))

    print("KERNEL_OK")
</pallas_src>

<mosaic_0001>
module attributes {stable_mosaic.version = 11 : i64} {
  func.func @_sn_linear_kernel(%arg0: i32, %arg1: memref<8x128xf32, #tpu.memory_space<vmem>>, %arg2: memref<2048x128xf32, #tpu.memory_space<vmem>>, %arg3: memref<1x2048xf32, #tpu.memory_space<vmem>>, %arg4: memref<1x2048xf32, #tpu.memory_space<vmem>>, %arg5: memref<8x2048xf32, #tpu.memory_space<vmem>>, %arg6: memref<1x1xf32, #tpu.memory_space<vmem>>) attributes {dimension_semantics = [#tpu.dimension_semantics<arbitrary>], iteration_bounds = array<i64: 1>, scalar_prefetch = 0 : i64, scratch_operands = 1 : i64, tpu.core_type = #tpu.core_type<tc>, window_params = [{transform_indices = @transform_0, window_bounds = array<i64: 8, 128>}, {pipeline_mode = #tpu.pipeline_mode<synchronous>, transform_indices = @transform_1, window_bounds = array<i64: 2048, 128>}, {pipeline_mode = #tpu.pipeline_mode<synchronous>, transform_indices = @transform_2, window_bounds = array<i64: 1, 2048>}, {pipeline_mode = #tpu.pipeline_mode<synchronous>, transform_indices = @transform_3, window_bounds = array<i64: 1, 2048>}, {transform_indices = @transform_4, window_bounds = array<i64: 8, 2048>}]} {
    %c0_i32 = arith.constant 0 : i32
    %0 = arith.cmpi eq, %arg0, %c0_i32 : i32
    %1 = arith.extui %0 : i1 to i32
    %c0_i32_0 = arith.constant 0 : i32
    %2 = arith.cmpi ne, %1, %c0_i32_0 : i32
    scf.if %2 {
      %c0_10 = arith.constant 0 : index
      %c0_11 = arith.constant 0 : index
      %13 = vector.load %arg2[%c0_10, %c0_11] : memref<2048x128xf32, #tpu.memory_space<vmem>>, vector<2048x128xf32>
      %c0_12 = arith.constant 0 : index
      %c0_13 = arith.constant 0 : index
      %14 = vector.load %arg4[%c0_12, %c0_13] : memref<1x2048xf32, #tpu.memory_space<vmem>>, vector<1x2048xf32>
      %cst_14 = arith.constant dense<0.000000e+00> : vector<1x128xf32>
      %15 = tpu.matmul %14, %13, %cst_14 {dimension_numbers = #tpu.dot_dimension_numbers<[1], [0], [0], [1], [0, 0, 1, 1], [], []>} : vector<1x2048xf32>, vector<2048x128xf32>, vector<1x128xf32> -> vector<1x128xf32>
      %16 = arith.mulf %15, %15 : vector<1x128xf32>
      %17 = vector.shape_cast %16 : vector<1x128xf32> to vector<1x1x128xf32>
      %cst_15 = arith.constant dense<0.000000e+00> : vector<1xf32>
      %18 = vector.multi_reduction <add>, %17, %cst_15 [1, 2] : vector<1x1x128xf32> to vector<1xf32>
      %19 = vector.shape_cast %18 : vector<1xf32> to vector<1x1x1xf32>
      %20 = vector.extract %19[0, 0, 0] : f32 from vector<1x1x1xf32>
      %21 = vector.broadcast %20 : f32 to vector<1x1xf32>
      %22 = math.sqrt %21 : vector<1x1xf32>
      %cst_16 = arith.constant 9.99999974E-5 : f32
      %23 = vector.broadcast %cst_16 : f32 to vector<1x1xf32>
      %24 = arith.addf %22, %23 : vector<1x1xf32>
      %cst_17 = arith.constant 1.000000e+00 : f32
      %25 = vector.broadcast %cst_17 : f32 to vector<1x1xf32>
      %26 = arith.divf %25, %24 : vector<1x1xf32>
      %27 = vector.broadcast %26 : vector<1x1xf32> to vector<1x128xf32>
      %28 = arith.mulf %15, %27 : vector<1x128xf32>
      %cst_18 = arith.constant dense<0.000000e+00> : vector<1x2048xf32>
      %29 = tpu.matmul %28, %13, %cst_18 {dimension_numbers = #tpu.dot_dimension_numbers<[1], [1], [0], [0], [0, 0, 1, 0], [], []>} : vector<1x128xf32>, vector<2048x128xf32>, vector<1x2048xf32> -> vector<1x2048xf32>
      %30 = arith.mulf %29, %29 : vector<1x2048xf32>
      %31 = vector.shape_cast %30 : vector<1x2048xf32> to vector<1x1x2048xf32>
      %cst_19 = arith.constant dense<0.000000e+00> : vector<1xf32>
      %32 = vector.multi_reduction <add>, %31, %cst_19 [1, 2] : vector<1x1x2048xf32> to vector<1xf32>
      %33 = vector.shape_cast %32 : vector<1xf32> to vector<1x1x1xf32>
      %34 = vector.extract %33[0, 0, 0] : f32 from vector<1x1x1xf32>
      %35 = vector.broadcast %34 : f32 to vector<1x1xf32>
      %36 = math.sqrt %35 : vector<1x1xf32>
      %cst_20 = arith.constant 9.99999974E-5 : f32
      %37 = vector.broadcast %cst_20 : f32 to vector<1x1xf32>
      %38 = arith.addf %36, %37 : vector<1x1xf32>
      %cst_21 = arith.constant 1.000000e+00 : f32
      %39 = vector.broadcast %cst_21 : f32 to vector<1x1xf32>
      %40 = arith.divf %39, %38 : vector<1x1xf32>
      %41 = vector.broadcast %40 : vector<1x1xf32> to vector<1x2048xf32>
      %42 = arith.mulf %29, %41 : vector<1x2048xf32>
      %43 = arith.mulf %42, %29 : vector<1x2048xf32>
      %44 = vector.shape_cast %43 : vector<1x2048xf32> to vector<1x1x2048xf32>
      %cst_22 = arith.constant dense<0.000000e+00> : vector<1xf32>
      %45 = vector.multi_reduction <add>, %44, %cst_22 [1, 2] : vector<1x1x2048xf32> to vector<1xf32>
      %46 = vector.shape_cast %45 : vector<1xf32> to vector<1x1x1xf32>
      %47 = vector.extract %46[0, 0, 0] : f32 from vector<1x1x1xf32>
      %48 = vector.broadcast %47 : f32 to vector<1x1xf32>
      %cst_23 = arith.constant 1.000000e+00 : f32
      %49 = vector.broadcast %cst_23 : f32 to vector<1x1xf32>
      %50 = arith.divf %49, %48 : vector<1x1xf32>
      %c0_24 = arith.constant 0 : index
      %c0_25 = arith.constant 0 : index
      %51 = vector.load %arg6[%c0_24, %c0_25] : memref<1x1xf32, #tpu.memory_space<vmem>>, vector<1x1xf32>
      tpu.vector_store %arg6[%c0_24, %c0_25], %50 {strides = array<i32>} : memref<1x1xf32, #tpu.memory_space<vmem>>, vector<1x1xf32>,
    } else {
    }
    %c0 = arith.constant 0 : index
    %c0_1 = arith.constant 0 : index
    %3 = vector.load %arg1[%c0, %c0_1] : memref<8x128xf32, #tpu.memory_space<vmem>>, vector<8x128xf32>
    %c0_2 = arith.constant 0 : index
    %c0_3 = arith.constant 0 : index
    %4 = vector.load %arg2[%c0_2, %c0_3] : memref<2048x128xf32, #tpu.memory_space<vmem>>, vector<2048x128xf32>
    %cst = arith.constant dense<0.000000e+00> : vector<8x2048xf32>
    %5 = tpu.matmul %3, %4, %cst {dimension_numbers = #tpu.dot_dimension_numbers<[1], [1], [0], [0], [0, 0, 1, 0], [], []>} : vector<8x128xf32>, vector<2048x128xf32>, vector<8x2048xf32> -> vector<8x2048xf32>
    %c0_4 = arith.constant 0 : index
    %c0_5 = arith.constant 0 : index
    %6 = vector.load %arg6[%c0_4, %c0_5] : memref<1x1xf32, #tpu.memory_space<vmem>>, vector<1x1xf32>
    %7 = vector.broadcast %6 : vector<1x1xf32> to vector<8x2048xf32>
    %8 = arith.mulf %5, %7 : vector<8x2048xf32>
    %c0_6 = arith.constant 0 : index
    %c0_7 = arith.constant 0 : index
    %9 = vector.load %arg3[%c0_6, %c0_7] : memref<1x2048xf32, #tpu.memory_space<vmem>>, vector<1x2048xf32>
    %10 = vector.broadcast %9 : vector<1x2048xf32> to vector<8x2048xf32>
    %11 = arith.addf %8, %10 : vector<8x2048xf32>
    %c0_8 = arith.constant 0 : index
    %c0_9 = arith.constant 0 : index
    %12 = vector.load %arg5[%c0_8, %c0_9] : memref<8x2048xf32, #tpu.memory_space<vmem>>, vector<8x2048xf32>
    tpu.vector_store %arg5[%c0_8, %c0_9], %11 {strides = array<i32>} : memref<8x2048xf32, #tpu.memory_space<vmem>>, vector<8x2048xf32>,
    return
  }
  func.func @transform_0(%arg0: i32) -> (i32, i32) {
    %c0_i32 = arith.constant 0 : i32
    %c0_i32_0 = arith.constant 0 : i32
    return %arg0, %c0_i32 : i32, i32
  }
  func.func @transform_1(%arg0: i32) -> (i32, i32) {
    %c0_i32 = arith.constant 0 : i32
    %c0_i32_0 = arith.constant 0 : i32
    %c0_i32_1 = arith.constant 0 : i32
    return %c0_i32, %c0_i32_0 : i32, i32
  }
  func.func @transform_2(%arg0: i32) -> (i32, i32) {
    %c0_i32 = arith.constant 0 : i32
    %c0_i32_0 = arith.constant 0 : i32
    %c0_i32_1 = arith.constant 0 : i32
    return %c0_i32, %c0_i32_0 : i32, i32
  }
  func.func @transform_3(%arg0: i32) -> (i32, i32) {
    %c0_i32 = arith.constant 0 : i32
    %c0_i32_0 = arith.constant 0 : i32
    %c0_i32_1 = arith.constant 0 : i32
    return %c0_i32, %c0_i32_0 : i32, i32
  }
  func.func @transform_4(%arg0: i32) -> (i32, i32) {
    %c0_i32 = arith.constant 0 : i32
    %c0_i32_0 = arith.constant 0 : i32
    return %arg0, %c0_i32 : i32, i32
  }
}

</mosaic_0001>

<llo_original>
// kernel: tpu_custom_call.1
$region0: #{tpu_custom_call.1}
  #allocation0 [shape = 'u32[]', space=smem, size = 0x4, offset = 0x4, fixed_abs, tag = 'smem constant byte address 0x4 - core index']
  #allocation1 [shape = 'u32[72,128]{1,0:T(1,128)}', space=vmem, size = 0x9000, scoped, tag = 'internal scratch']
  #allocation2 [shape = 'f32[1,1]{1,0:T(1,128)}', space=vmem, size = 0x200, scoped, tag = 'scratch operand']
  %s0 = inlined_call_operand.hbm [shape: f32[8,128], index: 0, kind: input, shape index: {}]
  %s1 = inlined_call_operand.hbm [shape: f32[2048,128], index: 1, kind: input, shape index: {}]
  %s2 = inlined_call_operand.hbm [shape: f32[1,2048], index: 2, kind: input, shape index: {}]
  %s3 = inlined_call_operand.hbm [shape: f32[1,2048], index: 3, kind: input, shape index: {}]
  %s4 = inlined_call_operand.hbm [shape: f32[8,2048], index: 4, kind: output, shape index: {}]
  %s5 = sld [smem:[#allocation0]]
  $region46: #{tpu_custom_call.1} parent=0
    _
  %s7 = ssub.s32 1, %s5
  %s8 = scalar_select 0, %s7, %s5
  $region1: #{tpu_custom_call.1} parent=0
    #allocation3 [shape = 'u8[4096]{0}', space=vmem, size = 0x1000, scoped, tag = 'input window, operand 0, single buffered']
    #allocation4 [shape = 's32[1]{0}', space=sflag, size = 0x4, scoped, tag = 'scoped memory for tpu_custom_call.1']
    #allocation5 [shape = 's32[1]{0}', space=sflag, size = 0x4, scoped, tag = 'scoped memory for tpu_custom_call.1']
    #allocation6 [shape = 'u8[1048576]{0}', space=vmem, size = 0x100000, scoped, tag = 'input window, operand 1, single buffered']
    #allocation7 [shape = 's32[1]{0}', space=sflag, size = 0x4, scoped, tag = 'scoped memory for tpu_custom_call.1']
    #allocation8 [shape = 'u8[8192]{0}', space=vmem, size = 0x2000, scoped, tag = 'input window, operand 2, single buffered']
    #allocation9 [shape = 'u8[8192]{0}', space=vmem, size = 0x2000, scoped, tag = 'input window, operand 3, single buffered']
    #allocation10 [shape = 's32[1]{0}', space=sflag, size = 0x4, scoped, tag = 'scoped memory for tpu_custom_call.1']
    #allocation11 [shape = 'u8[65536]{0}', space=vmem, size = 0x10000, scoped, tag = 'output window, operand 0, single buffered']
    %9 = vsyncpa [#allocation4], 0
    %10 = vsyncpa [#allocation7], 0
    %11 = vsyncpa [#allocation10], 0
    %12 = vsyncpa [#allocation5], 0
    // Predicated region
    $region2: #{tpu_custom_call.1} parent=1 // pred_check
      _
    $region3: #{tpu_custom_call.1} parent=1 // pred_check_branch
      %14 = sbr.rel (0) target = $region5
    $region4: #{tpu_custom_call.1} parent=1 // pred_region
      %16 = vsyncadd [#allocation4], 0
      %s18 = sshll.u32 %s0, 4
      %s19 = int_to_ptr.hbm [resolvable:$true] %s18
      %s20 = sshll.u32 [#allocation3], 4
      %s21 = int_to_ptr.vmem [resolvable:$true] %s20
      %23 = dma.hbm_to_vmem [thread:$0]  %s19, 128, %s21, [#allocation4]
    $region5: #{tpu_custom_call.1} parent=1 // pred_fallthru
      _
    // Predicated region
    $region6: #{tpu_custom_call.1} parent=1 // pred_check
      _
    $region7: #{tpu_custom_call.1} parent=1 // pred_check_branch
      %25 = sbr.rel (0) target = $region9
    $region8: #{tpu_custom_call.1} parent=1 // pred_region
      %27 = vsyncadd [#allocation7], 0
      %s28 = sshll.u32 %s1, 4
      %s29 = int_to_ptr.hbm [resolvable:$true] %s28
      %s30 = sshll.u32 [#allocation6], 4
      %s31 = int_to_ptr.vmem [resolvable:$true] %s30
      %36 = dma.hbm_to_vmem [thread:$0]  %s29, 32768, %s31, [#allocation7], 128, 128, 8
    $region9: #{tpu_custom_call.1} parent=1 // pred_fallthru
      _
    // Predicated region
    $region10: #{tpu_custom_call.1} parent=1 // pred_check
      _
    $region11: #{tpu_custom_call.1} parent=1 // pred_check_branch
      %38 = sbr.rel (0) target = $region13
    $region12: #{tpu_custom_call.1} parent=1 // pred_region
      %40 = vsyncadd [#allocation7], 0
      %s42 = sshll.u32 %s2, 4
      %s43 = int_to_ptr.hbm [resolvable:$true] %s42
      %s44 = sshll.u32 [#allocation8], 4
      %s45 = int_to_ptr.vmem [resolvable:$true] %s44
      %47 = dma.hbm_to_vmem [thread:$0]  %s43, 256, %s45, [#allocation7]
    $region13: #{tpu_custom_call.1} parent=1 // pred_fallthru
      _
    // Predicated region
    $region14: #{tpu_custom_call.1} parent=1 // pred_check
      _
    $region15: #{tpu_custom_call.1} parent=1 // pred_check_branch
      %49 = sbr.rel (0) target = $region17
    $region16: #{tpu_custom_call.1} parent=1 // pred_region
      %51 = vsyncadd [#allocation10], 0
      %s53 = sshll.u32 %s3, 4
      %s54 = int_to_ptr.hbm [resolvable:$true] %s53
      %s55 = sshll.u32 [#allocation9], 4
      %s56 = int_to_ptr.vmem [resolvable:$true] %s55
      %58 = dma.hbm_to_vmem [thread:$0]  %s54, 256, %s56, [#allocation10]
    $region17: #{tpu_custom_call.1} parent=1 // pred_fallthru
      _
    // Predicated region
    $region18: #{tpu_custom_call.1} parent=1 // pred_check
      _
    $region19: #{tpu_custom_call.1} parent=1 // pred_check_branch
      %60 = sbr.rel (0) target = $region21
    $region20: #{tpu_custom_call.1} parent=1 // pred_region
      %62 = dma.done [#allocation4], 128
    $region21: #{tpu_custom_call.1} parent=1 // pred_fallthru
      _
    // Predicated region
    $region22: #{tpu_custom_call.1} parent=1 // pred_check
      _
    $region23: #{tpu_custom_call.1} parent=1 // pred_check_branch
      %64 = sbr.rel (0) target = $region25
    $region24: #{tpu_custom_call.1} parent=1 // pred_region
      %66 = dma.done [#allocation7], 32768
    $region25: #{tpu_custom_call.1} parent=1 // pred_fallthru
      _
    // Predicated region
    $region26: #{tpu_custom_call.1} parent=1 // pred_check
      _
    $region27: #{tpu_custom_call.1} parent=1 // pred_check_branch
      %68 = sbr.rel (0) target = $region29
    $region28: #{tpu_custom_call.1} parent=1 // pred_region
      %70 = dma.done [#allocation7], 256
    $region29: #{tpu_custom_call.1} parent=1 // pred_fallthru
      _
    // Predicated region
    $region30: #{tpu_custom_call.1} parent=1 // pred_check
      _
    $region31: #{tpu_custom_call.1} parent=1 // pred_check_branch
      %72 = sbr.rel (0) target = $region33
    $region32: #{tpu_custom_call.1} parent=1 // pred_region
      %74 = dma.done [#allocation10], 256
    $region33: #{tpu_custom_call.1} parent=1 // pred_fallthru
      _
    %p75 = scmp.eq.s32.totalorder 0, 0
    // Predicated region
    $region34: #{tpu_custom_call.1} parent=1 // pred_check
      %p76 = pneg %p75
    $region35: #{tpu_custom_call.1} parent=1 // pred_check_branch
      %78 = sbr.rel (%p76) target = $region37
    $region36: #{tpu_custom_call.1} parent=1 // pred_region
      %v79 = vld [vmem:[#allocation6] sm:$0xff]
      %v80 = vld [vmem:[#allocation6 + $0x8] sm:$0xff]
      %v81 = vld [vmem:[#allocation6 + $0x10] sm:$0xff]
      %v82 = vld [vmem:[#allocation6 + $0x18] sm:$0xff]
      %v83 = vld [vmem:[#allocation6 + $0x20] sm:$0xff]
      %v84 = vld [vmem:[#allocation6 + $0x28] sm:$0xff]
      %v85 = vld [vmem:[#allocation6 + $0x30] sm:$0xff]
      %v86 = vld [vmem:[#allocation6 + $0x38] sm:$0xff]
      %v87 = vld [vmem:[#allocation6 + $0x40] sm:$0xff]
      %v88 = vld [vmem:[#allocation6 + $0x48] sm:$0xff]
      %v89 = vld [vmem:[#allocation6 + $0x50] sm:$0xff]
      %v90 = vld [vmem:[#allocation6 + $0x58] sm:$0xff]
      %v91 = vld [vmem:[#allocation6 + $0x60] sm:$0xff]
      %v92 = vld [vmem:[#allocation6 + $0x68] sm:$0xff]
      %v93 = vld [vmem:[#allocation6 + $0x70] sm:$0xff]
      %v94 = vld [vmem:[#allocation6 + $0x78] sm:$0xff]
      %v95 = vld [vmem:[#allocation6 + $0x80] sm:$0xff]
      %v96 = vld [vmem:[#allocation6 + $0x88] sm:$0xff]
      %v97 = vld [vmem:[#allocation6 + $0x90] sm:$0xff]
      %v98 = vld [vmem:[#allocation6 + $0x98] sm:$0xff]
      %v99 = vld [vmem:[#allocation6 + $0xa0] sm:$0xff]
      %v100 = vld [vmem:[#allocation6 + $0xa8] sm:$0xff]
      %v101 = vld [vmem:[#allocation6 + $0xb0] sm:$0xff]
      %v102 = vld [vmem:[#allocation6 + $0xb8] sm:$0xff]
      %v103 = vld [vmem:[#allocation6 + $0xc0] sm:$0xff]
      %v104 = vld [vmem:[#allocation6 + $0xc8] sm:$0xff]
      %v105 = vld [vmem:[#allocation6 + $0xd0] sm:$0xff]
      %v106 = vld [vmem:[#allocation6 + $0xd8] sm:$0xff]
      %v107 = vld [vmem:[#allocation6 + $0xe0] sm:$0xff]
      %v108 = vld [vmem:[#allocation6 + $0xe8] sm:$0xff]
      %v109 = vld [vmem:[#allocation6 + $0xf0] sm:$0xff]
      %v110 = vld [vmem:[#allocation6 + $0xf8] sm:$0xff]
      %v111 = vld [vmem:[#allocation6 + $0x100] sm:$0xff]
      %v112 = vld [vmem:[#allocation6 + $0x108] sm:$0xff]
      %v113 = vld [vmem:[#allocation6 + $0x110] sm:$0xff]
      %v114 = vld [vmem:[#allocation6 + $0x118] sm:$0xff]
      %v115 = vld [vmem:[#allocation6 + $0x120] sm:$0xff]
      %v116 = vld [vmem:[#allocation6 + $0x128] sm:$0xff]
      %v117 = vld [vmem:[#allocation6 + $0x130] sm:$0xff]
      %v118 = vld [vmem:[#allocation6 + $0x138] sm:$0xff]
      %v119 = vld [vmem:[#allocation6 + $0x140] sm:$0xff]
      %v120 = vld [vmem:[#allocation6 + $0x148] sm:$0xff]
      %v121 = vld [vmem:[#allocation6 + $0x150] sm:$0xff]
      %v122 = vld [vmem:[#allocation6 + $0x158] sm:$0xff]
      %v123 = vld [vmem:[#allocation6 + $0x160] sm:$0xff]
      %v124 = vld [vmem:[#allocation6 + $0x168] sm:$0xff]
      %v125 = vld [vmem:[#allocation6 + $0x170] sm:$0xff]
      %v126 = vld [vmem:[#allocation6 + $0x178] sm:$0xff]
      %v127 = vld [vmem:[#allocation6 + $0x180] sm:$0xff]
      %v128 = vld [vmem:[#allocation6 + $0x188] sm:$0xff]
      %v129 = vld [vmem:[#allocation6 + $0x190] sm:$0xff]
      %v130 = vld [vmem:[#allocation6 + $0x198] sm:$0xff]
      %v131 = vld [vmem:[#allocation6 + $0x1a0] sm:$0xff]
      %v132 = vld [vmem:[#allocation6 + $0x1a8] sm:$0xff]
      %v133 = vld [vmem:[#allocation6 + $0x1b0] sm:$0xff]
      %v134 = vld [vmem:[#allocation6 + $0x1b8] sm:$0xff]
      %v135 = vld [vmem:[#allocation6 + $0x1c0] sm:$0xff]
      %v136 = vld [vmem:[#allocation6 + $0x1c8] sm:$0xff]
      %v137 = vld [vmem:[#allocation6 + $0x1d0] sm:$0xff]
      %v138 = vld [vmem:[#allocation6 + $0x1d8] sm:$0xff]
      %v139 = vld [vmem:[#allocation6 + $0x1e0] sm:$0xff]
      %v140 = vld [vmem:[#allocation6 + $0x1e8] sm:$0xff]
      %v141 = vld [vmem:[#allocation6 + $0x1f0] sm:$0xff]
      %v142 = vld [vmem:[#allocation6 + $0x1f8] sm:$0xff]
      %v143 = vld [vmem:[#allocation6 + $0x200] sm:$0xff]
      %v144 = vld [vmem:[#allocation6 + $0x208] sm:$0xff]
      %v145 = vld [vmem:[#allocation6 + $0x210] sm:$0xff]
      %v146 = vld [vmem:[#allocation6 + $0x218] sm:$0xff]
      %v147 = vld [vmem:[#allocation6 + $0x220] sm:$0xff]
      %v148 = vld [vmem:[#allocation6 + $0x228] sm:$0xff]
      %v149 = vld [vmem:[#allocation6 + $0x230] sm:$0xff]
      %v150 = vld [vmem:[#allocation6 + $0x238] sm:$0xff]
      %v151 = vld [vmem:[#allocation6 + $0x240] sm:$0xff]
      %v152 = vld [vmem:[#allocation6 + $0x248] sm:$0xff]
      %v153 = vld [vmem:[#allocation6 + $0x250] sm:$0xff]
      %v154 = vld [vmem:[#allocation6 + $0x258] sm:$0xff]
      %v155 = vld [vmem:[#allocation6 + $0x260] sm:$0xff]
      %v156 = vld [vmem:[#allocation6 + $0x268] sm:$0xff]
      %v157 = vld [vmem:[#allocation6 + $0x270] sm:$0xff]
      %v158 = vld [vmem:[#allocation6 + $0x278] sm:$0xff]
      %v159 = vld [vmem:[#allocation6 + $0x280] sm:$0xff]
      %v160 = vld [vmem:[#allocation6 + $0x288] sm:$0xff]
      %v161 = vld [vmem:[#allocation6 + $0x290] sm:$0xff]
      %v162 = vld [vmem:[#allocation6 + $0x298] sm:$0xff]
      %v163 = vld [vmem:[#allocation6 + $0x2a0] sm:$0xff]
      %v164 = vld [vmem:[#allocation6 + $0x2a8] sm:$0xff]
      %v165 = vld [vmem:[#allocation6 + $0x2b0] sm:$0xff]
      %v166 = vld [vmem:[#allocation6 + $0x2b8] sm:$0xff]
      %v167 = vld [vmem:[#allocation6 + $0x2c0] sm:$0xff]
      %v168 = vld [vmem:[#allocation6 + $0x2c8] sm:$0xff]
      %v169 = vld [vmem:[#allocation6 + $0x2d0] sm:$0xff]
      %v170 = vld [vmem:[#allocation6 + $0x2d8] sm:$0xff]
      %v171 = vld [vmem:[#allocation6 + $0x2e0] sm:$0xff]
      %v172 = vld [vmem:[#allocation6 + $0x2e8] sm:$0xff]
      %v173 = vld [vmem:[#allocation6 + $0x2f0] sm:$0xff]
      %v174 = vld [vmem:[#allocation6 + $0x2f8] sm:$0xff]
      %v175 = vld [vmem:[#allocation6 + $0x300] sm:$0xff]
      %v176 = vld [vmem:[#allocation6 + $0x308] sm:$0xff]
      %v177 = vld [vmem:[#allocation6 + $0x310] sm:$0xff]
      %v178 = vld [vmem:[#allocation6 + $0x318] sm:$0xff]
      %v179 = vld [vmem:[#allocation6 + $0x320] sm:$0xff]
      %v180 = vld [vmem:[#allocation6 + $0x328] sm:$0xff]
      %v181 = vld [vmem:[#allocation6 + $0x330] sm:$0xff]
      %v182 = vld [vmem:[#allocation6 + $0x338] sm:$0xff]
      %v183 = vld [vmem:[#allocation6 + $0x340] sm:$0xff]
      %v184 = vld [vmem:[#allocation6 + $0x348] sm:$0xff]
      %v185 = vld [vmem:[#allocation6 + $0x350] sm:$0xff]
      %v186 = vld [vmem:[#allocation6 + $0x358] sm:$0xff]
      %v187 = vld [vmem:[#allocation6 + $0x360] sm:$0xff]
      %v188 = vld [vmem:[#allocation6 + $0x368] sm:$0xff]
      %v189 = vld [vmem:[#allocation6 + $0x370] sm:$0xff]
      %v190 = vld [vmem:[#allocation6 + $0x378] sm:$0xff]
      %v191 = vld [vmem:[#allocation6 + $0x380] sm:$0xff]
      %v192 = vld [vmem:[#allocation6 + $0x388] sm:$0xff]
      %v193 = vld [vmem:[#allocation6 + $0x390] sm:$0xff]
      %v194 = vld [vmem:[#allocation6 + $0x398] sm:$0xff]
      %v195 = vld [vmem:[#allocation6 + $0x3a0] sm:$0xff]
      %v196 = vld [vmem:[#allocation6 + $0x3a8] sm:$0xff]
      %v197 = vld [vmem:[#allocation6 + $0x3b0] sm:$0xff]
      %v198 = vld [vmem:[#allocation6 + $0x3b8] sm:$0xff]
      %v199 = vld [vmem:[#allocation6 + $0x3c0] sm:$0xff]
      %v200 = vld [vmem:[#allocation6 + $0x3c8] sm:$0xff]
      %v201 = vld [vmem:[#allocation6 + $0x3d0] sm:$0xff]
      %v202 = vld [vmem:[#allocation6 + $0x3d8] sm:$0xff]
      %v203 = vld [vmem:[#allocation6 + $0x3e0] sm:$0xff]
      %v204 = vld [vmem:[#allocation6 + $0x3e8] sm:$0xff]
      %v205 = vld [vmem:[#allocation6 + $0x3f0] sm:$0xff]
      %v206 = vld [vmem:[#allocation6 + $0x3f8] sm:$0xff]
      %v207 = vld [vmem:[#allocation6 + $0x400] sm:$0xff]
      %v208 = vld [vmem:[#allocation6 + $0x408] sm:$0xff]
      %v209 = vld [vmem:[#allocation6 + $0x410] sm:$0xff]
      %v210 = vld [vmem:[#allocation6 + $0x418] sm:$0xff]
      %v211 = vld [vmem:[#allocation6 + $0x420] sm:$0xff]
      %v212 = vld [vmem:[#allocation6 + $0x428] sm:$0xff]
      %v213 = vld [vmem:[#allocation6 + $0x430] sm:$0xff]
      %v214 = vld [vmem:[#allocation6 + $0x438] sm:$0xff]
      %v215 = vld [vmem:[#allocation6 + $0x440] sm:$0xff]
      %v216 = vld [vmem:[#allocation6 + $0x448] sm:$0xff]
      %v217 = vld [vmem:[#allocation6 + $0x450] sm:$0xff]
      %v218 = vld [vmem:[#allocation6 + $0x458] sm:$0xff]
      %v219 = vld [vmem:[#allocation6 + $0x460] sm:$0xff]
      %v220 = vld [vmem:[#allocation6 + $0x468] sm:$0xff]
      %v221 = vld [vmem:[#allocation6 + $0x470] sm:$0xff]
      %v222 = vld [vmem:[#allocation6 + $0x478] sm:$0xff]
      %v223 = vld [vmem:[#allocation6 + $0x480] sm:$0xff]
      %v224 = vld [vmem:[#allocation6 + $0x488] sm:$0xff]
      %v225 = vld [vmem:[#allocation6 + $0x490] sm:$0xff]
      %v226 = vld [vmem:[#allocation6 + $0x498] sm:$0xff]
      %v227 = vld [vmem:[#allocation6 + $0x4a0] sm:$0xff]
      %v228 = vld [vmem:[#allocation6 + $0x4a8] sm:$0xff]
      %v229 = vld [vmem:[#allocation6 + $0x4b0] sm:$0xff]
      %v230 = vld [vmem:[#allocation6 + $0x4b8] sm:$0xff]
      %v231 = vld [vmem:[#allocation6 + $0x4c0] sm:$0xff]
      %v232 = vld [vmem:[#allocation6 + $0x4c8] sm:$0xff]
      %v233 = vld [vmem:[#allocation6 + $0x4d0] sm:$0xff]
      %v234 = vld [vmem:[#allocation6 + $0x4d8] sm:$0xff]
      %v235 = vld [vmem:[#allocation6 + $0x4e0] sm:$0xff]
      %v236 = vld [vmem:[#allocation6 + $0x4e8] sm:$0xff]
      %v237 = vld [vmem:[#allocation6 + $0x4f0] sm:$0xff]
      %v238 = vld [vmem:[#allocation6 + $0x4f8] sm:$0xff]
      %v239 = vld [vmem:[#allocation6 + $0x500] sm:$0xff]
      %v240 = vld [vmem:[#allocation6 + $0x508] sm:$0xff]
      %v241 = vld [vmem:[#allocation6 + $0x510] sm:$0xff]
      %v242 = vld [vmem:[#allocation6 + $0x518] sm:$0xff]
      %v243 = vld [vmem:[#allocation6 + $0x520] sm:$0xff]
      %v244 = vld [vmem:[#allocation6 + $0x528] sm:$0xff]
      %v245 = vld [vmem:[#allocation6 + $0x530] sm:$0xff]
      %v246 = vld [vmem:[#allocation6 + $0x538] sm:$0xff]
      %v247 = vld [vmem:[#allocation6 + $0x540] sm:$0xff]
      %v248 = vld [vmem:[#allocation6 + $0x548] sm:$0xff]
      %v249 = vld [vmem:[#allocation6 + $0x550] sm:$0xff]
      %v250 = vld [vmem:[#allocation6 + $0x558] sm:$0xff]
      %v251 = vld [vmem:[#allocation6 + $0x560] sm:$0xff]
      %v252 = vld [vmem:[#allocation6 + $0x568] sm:$0xff]
      %v253 = vld [vmem:[#allocation6 + $0x570] sm:$0xff]
      %v254 = vld [vmem:[#allocation6 + $0x578] sm:$0xff]
      %v255 = vld [vmem:[#allocation6 + $0x580] sm:$0xff]
      %v256 = vld [vmem:[#allocation6 + $0x588] sm:$0xff]
      %v257 = vld [vmem:[#allocation6 + $0x590] sm:$0xff]
      %v258 = vld [vmem:[#allocation6 + $0x598] sm:$0xff]
      %v259 = vld [vmem:[#allocation6 + $0x5a0] sm:$0xff]
      %v260 = vld [vmem:[#allocation6 + $0x5a8] sm:$0xff]
      %v261 = vld [vmem:[#allocation6 + $0x5b0] sm:$0xff]
      %v262 = vld [vmem:[#allocation6 + $0x5b8] sm:$0xff]
      %v263 = vld [vmem:[#allocation6 + $0x5c0] sm:$0xff]
      %v264 = vld [vmem:[#allocation6 + $0x5c8] sm:$0xff]
      %v265 = vld [vmem:[#allocation6 + $0x5d0] sm:$0xff]
      %v266 = vld [vmem:[#allocation6 + $0x5d8] sm:$0xff]
      %v267 = vld [vmem:[#allocation6 + $0x5e0] sm:$0xff]
      %v268 = vld [vmem:[#allocation6 + $0x5e8] sm:$0xff]
      %v269 = vld [vmem:[#allocation6 + $0x5f0] sm:$0xff]
      %v270 = vld [vmem:[#allocation6 + $0x5f8] sm:$0xff]
      %v271 = vld [vmem:[#allocation6 + $0x600] sm:$0xff]
      %v272 = vld [vmem:[#allocation6 + $0x608] sm:$0xff]
      %v273 = vld [vmem:[#allocation6 + $0x610] sm:$0xff]
      %v274 = vld [vmem:[#allocation6 + $0x618] sm:$0xff]
      %v275 = vld [vmem:[#allocation6 + $0x620] sm:$0xff]
      %v276 = vld [vmem:[#allocation6 + $0x628] sm:$0xff]
      %v277 = vld [vmem:[#allocation6 + $0x630] sm:$0xff]
      %v278 = vld [vmem:[#allocation6 + $0x638] sm:$0xff]
      %v279 = vld [vmem:[#allocation6 + $0x640] sm:$0xff]
      %v280 = vld [vmem:[#allocation6 + $0x648] sm:$0xff]
      %v281 = vld [vmem:[#allocation6 + $0x650] sm:$0xff]
      %v282 = vld [vmem:[#allocation6 + $0x658] sm:$0xff]
      %v283 = vld [vmem:[#allocation6 + $0x660] sm:$0xff]
      %v284 = vld [vmem:[#allocation6 + $0x668] sm:$0xff]
      %v285 = vld [vmem:[#allocation6 + $0x670] sm:$0xff]
      %v286 = vld [vmem:[#allocation6 + $0x678] sm:$0xff]
      %v287 = vld [vmem:[#allocation6 + $0x680] sm:$0xff]
      %v288 = vld [vmem:[#allocation6 + $0x688] sm:$0xff]
      %v289 = vld [vmem:[#allocation6 + $0x690] sm:$0xff]
      %v290 = vld [vmem:[#allocation6 + $0x698] sm:$0xff]
      %v291 = vld [vmem:[#allocation6 + $0x6a0] sm:$0xff]
      %v292 = vld [vmem:[#allocation6 + $0x6a8] sm:$0xff]
      %v293 = vld [vmem:[#allocation6 + $0x6b0] sm:$0xff]
      %v294 = vld [vmem:[#allocation6 + $0x6b8] sm:$0xff]
      %v295 = vld [vmem:[#allocation6 + $0x6c0] sm:$0xff]
      %v296 = vld [vmem:[#allocation6 + $0x6c8] sm:$0xff]
      %v297 = vld [vmem:[#allocation6 + $0x6d0] sm:$0xff]
      %v298 = vld [vmem:[#allocation6 + $0x6d8] sm:$0xff]
      %v299 = vld [vmem:[#allocation6 + $0x6e0] sm:$0xff]
      %v300 = vld [vmem:[#allocation6 + $0x6e8] sm:$0xff]
      %v301 = vld [vmem:[#allocation6 + $0x6f0] sm:$0xff]
      %v302 = vld [vmem:[#allocation6 + $0x6f8] sm:$0xff]
      %v303 = vld [vmem:[#allocation6 + $0x700] sm:$0xff]
      %v304 = vld [vmem:[#allocation6 + $0x708] sm:$0xff]
      %v305 = vld [vmem:[#allocation6 + $0x710] sm:$0xff]
      %v306 = vld [vmem:[#allocation6 + $0x718] sm:$0xff]
      %v307 = vld [vmem:[#allocation6 + $0x720] sm:$0xff]
      %v308 = vld [vmem:[#allocation6 + $0x728] sm:$0xff]
      %v309 = vld [vmem:[#allocation6 + $0x730] sm:$0xff]
      %v310 = vld [vmem:[#allocation6 + $0x738] sm:$0xff]
      %v311 = vld [vmem:[#allocation6 + $0x740] sm:$0xff]
      %v312 = vld [vmem:[#allocation6 + $0x748] sm:$0xff]
      %v313 = vld [vmem:[#allocation6 + $0x750] sm:$0xff]
      %v314 = vld [vmem:[#allocation6 + $0x758] sm:$0xff]
      %v315 = vld [vmem:[#allocation6 + $0x760] sm:$0xff]
      %v316 = vld [vmem:[#allocation6 + $0x768] sm:$0xff]
      %v317 = vld [vmem:[#allocation6 + $0x770] sm:$0xff]
      %v318 = vld [vmem:[#allocation6 + $0x778] sm:$0xff]
      %v319 = vld [vmem:[#allocation6 + $0x780] sm:$0xff]
      %v320 = vld [vmem:[#allocation6 + $0x788] sm:$0xff]
      %v321 = vld [vmem:[#allocation6 + $0x790] sm:$0xff]
      %v322 = vld [vmem:[#allocation6 + $0x798] sm:$0xff]
      %v323 = vld [vmem:[#allocation6 + $0x7a0] sm:$0xff]
      %v324 = vld [vmem:[#allocation6 + $0x7a8] sm:$0xff]
      %v325 = vld [vmem:[#allocation6 + $0x7b0] sm:$0xff]
      %v326 = vld [vmem:[#allocation6 + $0x7b8] sm:$0xff]
      %v327 = vld [vmem:[#allocation6 + $0x7c0] sm:$0xff]
      %v328 = vld [vmem:[#allocation6 + $0x7c8] sm:$0xff]
      %v329 = vld [vmem:[#allocation6 + $0x7d0] sm:$0xff]
      %v330 = vld [vmem:[#allocation6 + $0x7d8] sm:$0xff]
      %v331 = vld [vmem:[#allocation6 + $0x7e0] sm:$0xff]
      %v332 = vld [vmem:[#allocation6 + $0x7e8] sm:$0xff]
      %v333 = vld [vmem:[#allocation6 + $0x7f0] sm:$0xff]
      %v334 = vld [vmem:[#allocation6 + $0x7f8] sm:$0xff]
      %v335 = vld [vmem:[#allocation9] sm:$0xff]
      %v336 = vld [vmem:[#allocation9 + $0x8] sm:$0xff]
      %v339 = vperm.slane %v335, 0
      %v340 = vperm.slane %v335, 1
      %v341 = vperm.slane %v335, 2
      %v342 = vperm.slane %v335, 3
      %v343 = vperm.slane %v335, 4
      %v344 = vperm.slane %v335, 5
      %v345 = vperm.slane %v335, 6
      %v346 = vperm.slane %v335, 7
      %v347 = vperm.slane %v336, 0
      %v348 = vperm.slane %v336, 1
      %v349 = vperm.slane %v336, 2
      %v350 = vperm.slane %v336, 3
      %v351 = vperm.slane %v336, 4
      %v352 = vperm.slane %v336, 5
      %v353 = vperm.slane %v336, 6
      %v354 = vperm.slane %v336, 7
      %371 = vmatpush.msra.mxu0 %v94
      %372 = vmatpush.msra.mxu0 %v93
      %373 = vmatpush.msra.mxu0 %v92
      %374 = vmatpush.msra.mxu0 %v91
      %375 = vmatpush.msra.mxu0 %v90
      %376 = vmatpush.msra.mxu0 %v89
      %377 = vmatpush.msra.mxu0 %v88
      %378 = vmatpush.msra.mxu0 %v87
      %379 = vmatpush.msra.mxu0 %v86
      %380 = vmatpush.msra.mxu0 %v85
      %381 = vmatpush.msra.mxu0 %v84
      %382 = vmatpush.msra.mxu0 %v83
      %383 = vmatpush.msra.mxu0 %v82
      %384 = vmatpush.msra.mxu0 %v81
      %385 = vmatpush.msra.mxu0 %v80
      %386 = vmatpush.msra.mxu0 %v79
      %387 = vmatmul.f32.gmra.mxu0 %v339
      %v388 = vpop.f32.mrf.mxu0
      %v389 = vadd.f32 0.0, %v388
      %390 = vdwg.mxu0
      %391 = vmatpush.msra.mxu0 %v110
      %392 = vmatpush.msra.mxu0 %v109
      %393 = vmatpush.msra.mxu0 %v108
      %394 = vmatpush.msra.mxu0 %v107
      %395 = vmatpush.msra.mxu0 %v106
      %396 = vmatpush.msra.mxu0 %v105
      %397 = vmatpush.msra.mxu0 %v104
      %398 = vmatpush.msra.mxu0 %v103
      %399 = vmatpush.msra.mxu0 %v102
      %400 = vmatpush.msra.mxu0 %v101
      %401 = vmatpush.msra.mxu0 %v100
      %402 = vmatpush.msra.mxu0 %v99
      %403 = vmatpush.msra.mxu0 %v98
      %404 = vmatpush.msra.mxu0 %v97
      %405 = vmatpush.msra.mxu0 %v96
      %406 = vmatpush.msra.mxu0 %v95
      %407 = vmatmul.f32.gmra.mxu0 %v340
      %v408 = vpop.f32.mrf.mxu0
      %v409 = vadd.f32 %v389, %v408
      %410 = vdwg.mxu0
      %411 = vmatpush.msra.mxu0 %v126
      %412 = vmatpush.msra.mxu0 %v125
      %413 = vmatpush.msra.mxu0 %v124
      %414 = vmatpush.msra.mxu0 %v123
      %415 = vmatpush.msra.mxu0 %v122
      %416 = vmatpush.msra.mxu0 %v121
      %417 = vmatpush.msra.mxu0 %v120
      %418 = vmatpush.msra.mxu0 %v119
      %419 = vmatpush.msra.mxu0 %v118
      %420 = vmatpush.msra.mxu0 %v117
      %421 = vmatpush.msra.mxu0 %v116
      %422 = vmatpush.msra.mxu0 %v115
      %423 = vmatpush.msra.mxu0 %v114
      %424 = vmatpush.msra.mxu0 %v113
      %425 = vmatpush.msra.mxu0 %v112
      %426 = vmatpush.msra.mxu0 %v111
      %427 = vmatmul.f32.gmra.mxu0 %v341
      %v428 = vpop.f32.mrf.mxu0
      %v429 = vadd.f32 %v409, %v428
      %430 = vdwg.mxu0
      %431 = vmatpush.msra.mxu0 %v142
      %432 = vmatpush.msra.mxu0 %v141
      %433 = vmatpush.msra.mxu0 %v140
      %434 = vmatpush.msra.mxu0 %v139
      %435 = vmatpush.msra.mxu0 %v138
      %436 = vmatpush.msra.mxu0 %v137
      %437 = vmatpush.msra.mxu0 %v136
      %438 = vmatpush.msra.mxu0 %v135
      %439 = vmatpush.msra.mxu0 %v134
      %440 = vmatpush.msra.mxu0 %v133
      %441 = vmatpush.msra.mxu0 %v132
      %442 = vmatpush.msra.mxu0 %v131
      %443 = vmatpush.msra.mxu0 %v130
      %444 = vmatpush.msra.mxu0 %v129
      %445 = vmatpush.msra.mxu0 %v128
      %446 = vmatpush.msra.mxu0 %v127
      %447 = vmatmul.f32.gmra.mxu0 %v342
      %v448 = vpop.f32.mrf.mxu0
      %v449 = vadd.f32 %v429, %v448
      %450 = vdwg.mxu0
      %451 = vmatpush.msra.mxu0 %v158
      %452 = vmatpush.msra.mxu0 %v157
      %453 = vmatpush.msra.mxu0 %v156
      %454 = vmatpush.msra.mxu0 %v155
      %455 = vmatpush.msra.mxu0 %v154
      %456 = vmatpush.msra.mxu0 %v153
      %457 = vmatpush.msra.mxu0 %v152
      %458 = vmatpush.msra.mxu0 %v151
      %459 = vmatpush.msra.mxu0 %v150
      %460 = vmatpush.msra.mxu0 %v149
      %461 = vmatpush.msra.mxu0 %v148
      %462 = vmatpush.msra.mxu0 %v147
      %463 = vmatpush.msra.mxu0 %v146
      %464 = vmatpush.msra.mxu0 %v145
      %465 = vmatpush.msra.mxu0 %v144
      %466 = vmatpush.msra.mxu0 %v143
      %467 = vmatmul.f32.gmra.mxu0 %v343
      %v468 = vpop.f32.mrf.mxu0
      %v469 = vadd.f32 %v449, %v468
      %470 = vdwg.mxu0
      %471 = vmatpush.msra.mxu0 %v174
      %472 = vmatpush.msra.mxu0 %v173
      %473 = vmatpush.msra.mxu0 %v172
      %474 = vmatpush.msra.mxu0 %v171
      %475 = vmatpush.msra.mxu0 %v170
      %476 = vmatpush.msra.mxu0 %v169
      %477 = vmatpush.msra.mxu0 %v168
      %478 = vmatpush.msra.mxu0 %v167
      %479 = vmatpush.msra.mxu0 %v166
      %480 = vmatpush.msra.mxu0 %v165
      %481 = vmatpush.msra.mxu0 %v164
      %482 = vmatpush.msra.mxu0 %v163
      %483 = vmatpush.msra.mxu0 %v162
      %484 = vmatpush.msra.mxu0 %v161
      %485 = vmatpush.msra.mxu0 %v160
      %486 = vmatpush.msra.mxu0 %v159
      %487 = vmatmul.f32.gmra.mxu0 %v344
      %v488 = vpop.f32.mrf.mxu0
      %v489 = vadd.f32 %v469, %v488
      %490 = vdwg.mxu0
      %491 = vmatpush.msra.mxu0 %v190
      %492 = vmatpush.msra.mxu0 %v189
      %493 = vmatpush.msra.mxu0 %v188
      %494 = vmatpush.msra.mxu0 %v187
      %495 = vmatpush.msra.mxu0 %v186
      %496 = vmatpush.msra.mxu0 %v185
      %497 = vmatpush.msra.mxu0 %v184
      %498 = vmatpush.msra.mxu0 %v183
      %499 = vmatpush.msra.mxu0 %v182
      %500 = vmatpush.msra.mxu0 %v181
      %501 = vmatpush.msra.mxu0 %v180
      %502 = vmatpush.msra.mxu0 %v179
      %503 = vmatpush.msra.mxu0 %v178
      %504 = vmatpush.msra.mxu0 %v177
      %505 = vmatpush.msra.mxu0 %v176
      %506 = vmatpush.msra.mxu0 %v175
      %507 = vmatmul.f32.gmra.mxu0 %v345
      %v508 = vpop.f32.mrf.mxu0
      %v509 = vadd.f32 %v489, %v508
      %510 = vdwg.mxu0
      %511 = vmatpush.msra.mxu0 %v206
      %512 = vmatpush.msra.mxu0 %v205
      %513 = vmatpush.msra.mxu0 %v204
      %514 = vmatpush.msra.mxu0 %v203
      %515 = vmatpush.msra.mxu0 %v202
      %516 = vmatpush.msra.mxu0 %v201
      %517 = vmatpush.msra.mxu0 %v200
      %518 = vmatpush.msra.mxu0 %v199
      %519 = vmatpush.msra.mxu0 %v198
      %520 = vmatpush.msra.mxu0 %v197
      %521 = vmatpush.msra.mxu0 %v196
      %522 = vmatpush.msra.mxu0 %v195
      %523 = vmatpush.msra.mxu0 %v194
      %524 = vmatpush.msra.mxu0 %v193
      %525 = vmatpush.msra.mxu0 %v192
      %526 = vmatpush.msra.mxu0 %v191
      %527 = vmatmul.f32.gmra.mxu0 %v346
      %v528 = vpop.f32.mrf.mxu0
      %v529 = vadd.f32 %v509, %v528
      %530 = vdwg.mxu0
      %531 = vmatpush.msra.mxu0 %v222
      %532 = vmatpush.msra.mxu0 %v221
      %533 = vmatpush.msra.mxu0 %v220
      %534 = vmatpush.msra.mxu0 %v219
      %535 = vmatpush.msra.mxu0 %v218
      %536 = vmatpush.msra.mxu0 %v217
      %537 = vmatpush.msra.mxu0 %v216
      %538 = vmatpush.msra.mxu0 %v215
      %539 = vmatpush.msra.mxu0 %v214
      %540 = vmatpush.msra.mxu0 %v213
      %541 = vmatpush.msra.mxu0 %v212
      %542 = vmatpush.msra.mxu0 %v211
      %543 = vmatpush.msra.mxu0 %v210
      %544 = vmatpush.msra.mxu0 %v209
      %545 = vmatpush.msra.mxu0 %v208
      %546 = vmatpush.msra.mxu0 %v207
      %547 = vmatmul.f32.gmra.mxu0 %v347
      %v548 = vpop.f32.mrf.mxu0
      %v549 = vadd.f32 %v529, %v548
      %550 = vdwg.mxu0
      %551 = vmatpush.msra.mxu0 %v238
      %552 = vmatpush.msra.mxu0 %v237
      %553 = vmatpush.msra.mxu0 %v236
      %554 = vmatpush.msra.mxu0 %v235
      %555 = vmatpush.msra.mxu0 %v234
      %556 = vmatpush.msra.mxu0 %v233
      %557 = vmatpush.msra.mxu0 %v232
      %558 = vmatpush.msra.mxu0 %v231
      %559 = vmatpush.msra.mxu0 %v230
      %560 = vmatpush.msra.mxu0 %v229
      %561 = vmatpush.msra.mxu0 %v228
      %562 = vmatpush.msra.mxu0 %v227
      %563 = vmatpush.msra.mxu0 %v226
      %564 = vmatpush.msra.mxu0 %v225
      %565 = vmatpush.msra.mxu0 %v224
      %566 = vmatpush.msra.mxu0 %v223
      %567 = vmatmul.f32.gmra.mxu0 %v348
      %v568 = vpop.f32.mrf.mxu0
      %v569 = vadd.f32 %v549, %v568
      %570 = vdwg.mxu0
      %571 = vmatpush.msra.mxu0 %v254
      %572 = vmatpush.msra.mxu0 %v253
      %573 = vmatpush.msra.mxu0 %v252
      %574 = vmatpush.msra.mxu0 %v251
      %575 = vmatpush.msra.mxu0 %v250
      %576 = vmatpush.msra.mxu0 %v249
      %577 = vmatpush.msra.mxu0 %v248
      %578 = vmatpush.msra.mxu0 %v247
      %579 = vmatpush.msra.mxu0 %v246
      %580 = vmatpush.msra.mxu0 %v245
      %581 = vmatpush.msra.mxu0 %v244
      %582 = vmatpush.msra.mxu0 %v243
      %583 = vmatpush.msra.mxu0 %v242
      %584 = vmatpush.msra.mxu0 %v241
      %585 = vmatpush.msra.mxu0 %v240
      %586 = vmatpush.msra.mxu0 %v239
      %587 = vmatmul.f32.gmra.mxu0 %v349
      %v588 = vpop.f32.mrf.mxu0
      %v589 = vadd.f32 %v569, %v588
      %590 = vdwg.mxu0
      %591 = vmatpush.msra.mxu0 %v270
      %592 = vmatpush.msra.mxu0 %v269
      %593 = vmatpush.msra.mxu0 %v268
      %594 = vmatpush.msra.mxu0 %v267
      %595 = vmatpush.msra.mxu0 %v266
      %596 = vmatpush.msra.mxu0 %v265
      %597 = vmatpush.msra.mxu0 %v264
      %598 = vmatpush.msra.mxu0 %v263
      %599 = vmatpush.msra.mxu0 %v262
      %600 = vmatpush.msra.mxu0 %v261
      %601 = vmatpush.msra.mxu0 %v260
      %602 = vmatpush.msra.mxu0 %v259
      %603 = vmatpush.msra.mxu0 %v258
      %604 = vmatpush.msra.mxu0 %v257
      %605 = vmatpush.msra.mxu0 %v256
      %606 = vmatpush.msra.mxu0 %v255
      %607 = vmatmul.f32.gmra.mxu0 %v350
      %v608 = vpop.f32.mrf.mxu0
      %v609 = vadd.f32 %v589, %v608
      %610 = vdwg.mxu0
      %611 = vmatpush.msra.mxu0 %v286
      %612 = vmatpush.msra.mxu0 %v285
      %613 = vmatpush.msra.mxu0 %v284
      %614 = vmatpush.msra.mxu0 %v283
      %615 = vmatpush.msra.mxu0 %v282
      %616 = vmatpush.msra.mxu0 %v281
      %617 = vmatpush.msra.mxu0 %v280
      %618 = vmatpush.msra.mxu0 %v279
      %619 = vmatpush.msra.mxu0 %v278
      %620 = vmatpush.msra.mxu0 %v277
      %621 = vmatpush.msra.mxu0 %v276
      %622 = vmatpush.msra.mxu0 %v275
      %623 = vmatpush.msra.mxu0 %v274
      %624 = vmatpush.msra.mxu0 %v273
      %625 = vmatpush.msra.mxu0 %v272
      %626 = vmatpush.msra.mxu0 %v271
      %627 = vmatmul.f32.gmra.mxu0 %v351
      %v628 = vpop.f32.mrf.mxu0
      %v629 = vadd.f32 %v609, %v628
      %630 = vdwg.mxu0
      %631 = vmatpush.msra.mxu0 %v302
      %632 = vmatpush.msra.mxu0 %v301
      %633 = vmatpush.msra.mxu0 %v300
      %634 = vmatpush.msra.mxu0 %v299
      %635 = vmatpush.msra.mxu0 %v298
      %636 = vmatpush.msra.mxu0 %v297
      %637 = vmatpush.msra.mxu0 %v296
      %638 = vmatpush.msra.mxu0 %v295
      %639 = vmatpush.msra.mxu0 %v294
      %640 = vmatpush.msra.mxu0 %v293
      %641 = vmatpush.msra.mxu0 %v292
      %642 = vmatpush.msra.mxu0 %v291
      %643 = vmatpush.msra.mxu0 %v290
      %644 = vmatpush.msra.mxu0 %v289
      %645 = vmatpush.msra.mxu0 %v288
      %646 = vmatpush.msra.mxu0 %v287
      %647 = vmatmul.f32.gmra.mxu0 %v352
      %v648 = vpop.f32.mrf.mxu0
      %v649 = vadd.f32 %v629, %v648
      %650 = vdwg.mxu0
      %651 = vmatpush.msra.mxu0 %v318
      %652 = vmatpush.msra.mxu0 %v317
      %653 = vmatpush.msra.mxu0 %v316
      %654 = vmatpush.msra.mxu0 %v315
      %655 = vmatpush.msra.mxu0 %v314
      %656 = vmatpush.msra.mxu0 %v313
      %657 = vmatpush.msra.mxu0 %v312
      %658 = vmatpush.msra.mxu0 %v311
      %659 = vmatpush.msra.mxu0 %v310
      %660 = vmatpush.msra.mxu0 %v309
      %661 = vmatpush.msra.mxu0 %v308
      %662 = vmatpush.msra.mxu0 %v307
      %663 = vmatpush.msra.mxu0 %v306
      %664 = vmatpush.msra.mxu0 %v305
      %665 = vmatpush.msra.mxu0 %v304
      %666 = vmatpush.msra.mxu0 %v303
      %667 = vmatmul.f32.gmra.mxu0 %v353
      %v668 = vpop.f32.mrf.mxu0
      %v669 = vadd.f32 %v649, %v668
      %670 = vdwg.mxu0
      %671 = vmatpush.msra.mxu0 %v334
      %672 = vmatpush.msra.mxu0 %v333
      %673 = vmatpush.msra.mxu0 %v332
      %674 = vmatpush.msra.mxu0 %v331
      %675 = vmatpush.msra.mxu0 %v330
      %676 = vmatpush.msra.mxu0 %v329
      %677 = vmatpush.msra.mxu0 %v328
      %678 = vmatpush.msra.mxu0 %v327
      %679 = vmatpush.msra.mxu0 %v326
      %680 = vmatpush.msra.mxu0 %v325
      %681 = vmatpush.msra.mxu0 %v324
      %682 = vmatpush.msra.mxu0 %v323
      %683 = vmatpush.msra.mxu0 %v322
      %684 = vmatpush.msra.mxu0 %v321
      %685 = vmatpush.msra.mxu0 %v320
      %686 = vmatpush.msra.mxu0 %v319
      %687 = vmatmul.f32.gmra.mxu0 %v354
      %v688 = vpop.f32.mrf.mxu0
      %v689 = vadd.f32 %v669, %v688
      %690 = vdwg.mxu0
      %v691 = vmul.f32 %v689, %v689
      %vm692 = vcmask 1040384
      %v693 = vsel %vm692, %v691, 0.0
      %694 = vadd.xlane.f32.xlu0 %v693
      %v695 = vpop.xlane.xlu0 %694
      %v696 = vrot.slane %v695, 4
      %v697 = vadd.f32 %v695, %v696
      %v698 = vrot.slane %v697, 2
      %v699 = vadd.f32 %v697, %v698
      %v700 = vrot.slane %v699, 1
      %v701 = vadd.f32 %v699, %v700
      %s702 = vtos %v701
      %v703 = vstv %s702
      %v704 = vrsqrt.pop %v703
      %v705 = vmul.f32 %v704, %v703
      %v706 = vmul.f32 %v705, %v704
      %v707 = vmul.f32 0.5, %v706
      %v708 = vsub.f32 1.5, %v707
      %v709 = vmul.f32 %v704, %v708
      %v710 = vmul.f32 %v703, %v709
      %vm711 = vcmp.eq.f32.partialorder %v703, inf
      %v712 = vsel %vm711, %v703, %v710
      %vm713 = vcmp.eq.f32.partialorder %v703, 0.0
      %v714 = vand.u32 %v703, 2147483648
      %v715 = vsel %vm713, %v714, %v712
      %v716 = vadd.f32 %v715, 0.0001
      %v717 = vrcp.pop %v716
      %v718 = vmul.f32 %v716, %v717
      %v719 = vsub.f32 1.0, %v718
      %v720 = vmul.f32 %v717, %v719
      %v721 = vadd.f32 %v717, %v720
      %vm722 = vweird.f32 %v716
      %vm723 = vweird.f32 %v717
      %vm724 = vmor %vm722, %vm723
      %v725 = vsel %vm724, %v717, %v721
      %v726 = vand.u32 2147483647, %v716
      %vm727 = vcmp.eq.f32.partialorder %v726, 8.507059e+37
      %v728 = vand.u32 %v716, 2147483648
      %v729 = vor.u32 1.1754944e-38, %v728
      %v730 = vsel %vm727, %v729, %v725
      %v731 = vmul.f32 1.0, %v730
      %v732 = vmul.f32 %v689, %v731
      %733 = vmatpush.xpose.msra.mxu0 %v94
      %734 = vmatpush.xpose.msra.mxu0 %v93
      %735 = vmatpush.xpose.msra.mxu0 %v92
      %736 = vmatpush.xpose.msra.mxu0 %v91
      %737 = vmatpush.xpose.msra.mxu0 %v90
      %738 = vmatpush.xpose.msra.mxu0 %v89
      %739 = vmatpush.xpose.msra.mxu0 %v88
      %740 = vmatpush.xpose.msra.mxu0 %v87
      %741 = vmatpush.xpose.msra.mxu0 %v86
      %742 = vmatpush.xpose.msra.mxu0 %v85
      %743 = vmatpush.xpose.msra.mxu0 %v84
      %744 = vmatpush.xpose.msra.mxu0 %v83
      %745 = vmatpush.xpose.msra.mxu0 %v82
      %746 = vmatpush.xpose.msra.mxu0 %v81
      %747 = vmatpush.xpose.msra.mxu0 %v80
      %748 = vmatpush.xpose.msra.mxu0 %v79
      %749 = vmatmul.f32.gmra.mxu0 %v732
      %v750 = vpop.f32.mrf.mxu0
      %v751 = vadd.f32 0.0, %v750
      %752 = vdwg.mxu0
      %753 = vmatpush.xpose.msra.mxu0 %v110
      %754 = vmatpush.xpose.msra.mxu0 %v109
      %755 = vmatpush.xpose.msra.mxu0 %v108
      %756 = vmatpush.xpose.msra.mxu0 %v107
      %757 = vmatpush.xpose.msra.mxu0 %v106
      %758 = vmatpush.xpose.msra.mxu0 %v105
      %759 = vmatpush.xpose.msra.mxu0 %v104
      %760 = vmatpush.xpose.msra.mxu0 %v103
      %761 = vmatpush.xpose.msra.mxu0 %v102
      %762 = vmatpush.xpose.msra.mxu0 %v101
      %763 = vmatpush.xpose.msra.mxu0 %v100
      %764 = vmatpush.xpose.msra.mxu0 %v99
      %765 = vmatpush.xpose.msra.mxu0 %v98
      %766 = vmatpush.xpose.msra.mxu0 %v97
      %767 = vmatpush.xpose.msra.mxu0 %v96
      %768 = vmatpush.xpose.msra.mxu0 %v95
      %769 = vmatmul.f32.gmra.mxu0 %v732
      %v770 = vpop.f32.mrf.mxu0
      %v771 = vadd.f32 0.0, %v770
      %772 = vdwg.mxu0
      %773 = vmatpush.xpose.msra.mxu0 %v126
      %774 = vmatpush.xpose.msra.mxu0 %v125
      %775 = vmatpush.xpose.msra.mxu0 %v124
      %776 = vmatpush.xpose.msra.mxu0 %v123
      %777 = vmatpush.xpose.msra.mxu0 %v122
      %778 = vmatpush.xpose.msra.mxu0 %v121
      %779 = vmatpush.xpose.msra.mxu0 %v120
      %780 = vmatpush.xpose.msra.mxu0 %v119
      %781 = vmatpush.xpose.msra.mxu0 %v118
      %782 = vmatpush.xpose.msra.mxu0 %v117
      %783 = vmatpush.xpose.msra.mxu0 %v116
      %784 = vmatpush.xpose.msra.mxu0 %v115
      %785 = vmatpush.xpose.msra.mxu0 %v114
      %786 = vmatpush.xpose.msra.mxu0 %v113
      %787 = vmatpush.xpose.msra.mxu0 %v112
      %788 = vmatpush.xpose.msra.mxu0 %v111
      %789 = vmatmul.f32.gmra.mxu0 %v732
      %v790 = vpop.f32.mrf.mxu0
      %v791 = vadd.f32 0.0, %v790
      %792 = vdwg.mxu0
      %793 = vmatpush.xpose.msra.mxu0 %v142
      %794 = vmatpush.xpose.msra.mxu0 %v141
      %795 = vmatpush.xpose.msra.mxu0 %v140
      %796 = vmatpush.xpose.msra.mxu0 %v139
      %797 = vmatpush.xpose.msra.mxu0 %v138
      %798 = vmatpush.xpose.msra.mxu0 %v137
      %799 = vmatpush.xpose.msra.mxu0 %v136
      %800 = vmatpush.xpose.msra.mxu0 %v135
      %801 = vmatpush.xpose.msra.mxu0 %v134
      %802 = vmatpush.xpose.msra.mxu0 %v133
      %803 = vmatpush.xpose.msra.mxu0 %v132
      %804 = vmatpush.xpose.msra.mxu0 %v131
      %805 = vmatpush.xpose.msra.mxu0 %v130
      %806 = vmatpush.xpose.msra.mxu0 %v129
      %807 = vmatpush.xpose.msra.mxu0 %v128
      %808 = vmatpush.xpose.msra.mxu0 %v127
      %809 = vmatmul.f32.gmra.mxu0 %v732
      %v810 = vpop.f32.mrf.mxu0
      %v811 = vadd.f32 0.0, %v810
      %812 = vdwg.mxu0
      %813 = vmatpush.xpose.msra.mxu0 %v158
      %814 = vmatpush.xpose.msra.mxu0 %v157
      %815 = vmatpush.xpose.msra.mxu0 %v156
      %816 = vmatpush.xpose.msra.mxu0 %v155
      %817 = vmatpush.xpose.msra.mxu0 %v154
      %818 = vmatpush.xpose.msra.mxu0 %v153
      %819 = vmatpush.xpose.msra.mxu0 %v152
      %820 = vmatpush.xpose.msra.mxu0 %v151
      %821 = vmatpush.xpose.msra.mxu0 %v150
      %822 = vmatpush.xpose.msra.mxu0 %v149
      %823 = vmatpush.xpose.msra.mxu0 %v148
      %824 = vmatpush.xpose.msra.mxu0 %v147
      %825 = vmatpush.xpose.msra.mxu0 %v146
      %826 = vmatpush.xpose.msra.mxu0 %v145
      %827 = vmatpush.xpose.msra.mxu0 %v144
      %828 = vmatpush.xpose.msra.mxu0 %v143
      %829 = vmatmul.f32.gmra.mxu0 %v732
      %v830 = vpop.f32.mrf.mxu0
      %v831 = vadd.f32 0.0, %v830
      %832 = vdwg.mxu0
      %833 = vmatpush.xpose.msra.mxu0 %v174
      %834 = vmatpush.xpose.msra.mxu0 %v173
      %835 = vmatpush.xpose.msra.mxu0 %v172
      %836 = vmatpush.xpose.msra.mxu0 %v171
      %837 = vmatpush.xpose.msra.mxu0 %v170
      %838 = vmatpush.xpose.msra.mxu0 %v169
      %839 = vmatpush.xpose.msra.mxu0 %v168
      %840 = vmatpush.xpose.msra.mxu0 %v167
      %841 = vmatpush.xpose.msra.mxu0 %v166
      %842 = vmatpush.xpose.msra.mxu0 %v165
      %843 = vmatpush.xpose.msra.mxu0 %v164
      %844 = vmatpush.xpose.msra.mxu0 %v163
      %845 = vmatpush.xpose.msra.mxu0 %v162
      %846 = vmatpush.xpose.msra.mxu0 %v161
      %847 = vmatpush.xpose.msra.mxu0 %v160
      %848 = vmatpush.xpose.msra.mxu0 %v159
      %849 = vmatmul.f32.gmra.mxu0 %v732
      %v850 = vpop.f32.mrf.mxu0
      %v851 = vadd.f32 0.0, %v850
      %852 = vdwg.mxu0
      %853 = vmatpush.xpose.msra.mxu0 %v190
      %854 = vmatpush.xpose.msra.mxu0 %v189
      %855 = vmatpush.xpose.msra.mxu0 %v188
      %856 = vmatpush.xpose.msra.mxu0 %v187
      %857 = vmatpush.xpose.msra.mxu0 %v186
      %858 = vmatpush.xpose.msra.mxu0 %v185
      %859 = vmatpush.xpose.msra.mxu0 %v184
      %860 = vmatpush.xpose.msra.mxu0 %v183
      %861 = vmatpush.xpose.msra.mxu0 %v182
      %862 = vmatpush.xpose.msra.mxu0 %v181
      %863 = vmatpush.xpose.msra.mxu0 %v180
      %864 = vmatpush.xpose.msra.mxu0 %v179
      %865 = vmatpush.xpose.msra.mxu0 %v178
      %866 = vmatpush.xpose.msra.mxu0 %v177
      %867 = vmatpush.xpose.msra.mxu0 %v176
      %868 = vmatpush.xpose.msra.mxu0 %v175
      %869 = vmatmul.f32.gmra.mxu0 %v732
      %v870 = vpop.f32.mrf.mxu0
      %v871 = vadd.f32 0.0, %v870
      %872 = vdwg.mxu0
      %873 = vmatpush.xpose.msra.mxu0 %v206
      %874 = vmatpush.xpose.msra.mxu0 %v205
      %875 = vmatpush.xpose.msra.mxu0 %v204
      %876 = vmatpush.xpose.msra.mxu0 %v203
      %877 = vmatpush.xpose.msra.mxu0 %v202
      %878 = vmatpush.xpose.msra.mxu0 %v201
      %879 = vmatpush.xpose.msra.mxu0 %v200
      %880 = vmatpush.xpose.msra.mxu0 %v199
      %881 = vmatpush.xpose.msra.mxu0 %v198
      %882 = vmatpush.xpose.msra.mxu0 %v197
      %883 = vmatpush.xpose.msra.mxu0 %v196
      %884 = vmatpush.xpose.msra.mxu0 %v195
      %885 = vmatpush.xpose.msra.mxu0 %v194
      %886 = vmatpush.xpose.msra.mxu0 %v193
      %887 = vmatpush.xpose.msra.mxu0 %v192
      %888 = vmatpush.xpose.msra.mxu0 %v191
      %889 = vmatmul.f32.gmra.mxu0 %v732
      %v890 = vpop.f32.mrf.mxu0
      %v891 = vadd.f32 0.0, %v890
      %892 = vdwg.mxu0
      %893 = vmatpush.xpose.msra.mxu0 %v222
      %894 = vmatpush.xpose.msra.mxu0 %v221
      %895 = vmatpush.xpose.msra.mxu0 %v220
      %896 = vmatpush.xpose.msra.mxu0 %v219
      %897 = vmatpush.xpose.msra.mxu0 %v218
      %898 = vmatpush.xpose.msra.mxu0 %v217
      %899 = vmatpush.xpose.msra.mxu0 %v216
      %900 = vmatpush.xpose.msra.mxu0 %v215
      %901 = vmatpush.xpose.msra.mxu0 %v214
      %902 = vmatpush.xpose.msra.mxu0 %v213
      %903 = vmatpush.xpose.msra.mxu0 %v212
      %904 = vmatpush.xpose.msra.mxu0 %v211
      %905 = vmatpush.xpose.msra.mxu0 %v210
      %906 = vmatpush.xpose.msra.mxu0 %v209
      %907 = vmatpush.xpose.msra.mxu0 %v208
      %908 = vmatpush.xpose.msra.mxu0 %v207
      %909 = vmatmul.f32.gmra.mxu0 %v732
      %v910 = vpop.f32.mrf.mxu0
      %v911 = vadd.f32 0.0, %v910
      %912 = vdwg.mxu0
      %913 = vmatpush.xpose.msra.mxu0 %v238
      %914 = vmatpush.xpose.msra.mxu0 %v237
      %915 = vmatpush.xpose.msra.mxu0 %v236
      %916 = vmatpush.xpose.msra.mxu0 %v235
      %917 = vmatpush.xpose.msra.mxu0 %v234
      %918 = vmatpush.xpose.msra.mxu0 %v233
      %919 = vmatpush.xpose.msra.mxu0 %v232
      %920 = vmatpush.xpose.msra.mxu0 %v231
      %921 = vmatpush.xpose.msra.mxu0 %v230
      %922 = vmatpush.xpose.msra.mxu0 %v229
      %923 = vmatpush.xpose.msra.mxu0 %v228
      %924 = vmatpush.xpose.msra.mxu0 %v227
      %925 = vmatpush.xpose.msra.mxu0 %v226
      %926 = vmatpush.xpose.msra.mxu0 %v225
      %927 = vmatpush.xpose.msra.mxu0 %v224
      %928 = vmatpush.xpose.msra.mxu0 %v223
      %929 = vmatmul.f32.gmra.mxu0 %v732
      %v930 = vpop.f32.mrf.mxu0
      %v931 = vadd.f32 0.0, %v930
      %932 = vdwg.mxu0
      %933 = vmatpush.xpose.msra.mxu0 %v254
      %934 = vmatpush.xpose.msra.mxu0 %v253
      %935 = vmatpush.xpose.msra.mxu0 %v252
      %936 = vmatpush.xpose.msra.mxu0 %v251
      %937 = vmatpush.xpose.msra.mxu0 %v250
      %938 = vmatpush.xpose.msra.mxu0 %v249
      %939 = vmatpush.xpose.msra.mxu0 %v248
      %940 = vmatpush.xpose.msra.mxu0 %v247
      %941 = vmatpush.xpose.msra.mxu0 %v246
      %942 = vmatpush.xpose.msra.mxu0 %v245
      %943 = vmatpush.xpose.msra.mxu0 %v244
      %944 = vmatpush.xpose.msra.mxu0 %v243
      %945 = vmatpush.xpose.msra.mxu0 %v242
      %946 = vmatpush.xpose.msra.mxu0 %v241
      %947 = vmatpush.xpose.msra.mxu0 %v240
      %948 = vmatpush.xpose.msra.mxu0 %v239
      %949 = vmatmul.f32.gmra.mxu0 %v732
      %v950 = vpop.f32.mrf.mxu0
      %v951 = vadd.f32 0.0, %v950
      %952 = vdwg.mxu0
      %953 = vmatpush.xpose.msra.mxu0 %v270
      %954 = vmatpush.xpose.msra.mxu0 %v269
      %955 = vmatpush.xpose.msra.mxu0 %v268
      %956 = vmatpush.xpose.msra.mxu0 %v267
      %957 = vmatpush.xpose.msra.mxu0 %v266
      %958 = vmatpush.xpose.msra.mxu0 %v265
      %959 = vmatpush.xpose.msra.mxu0 %v264
      %960 = vmatpush.xpose.msra.mxu0 %v263
      %961 = vmatpush.xpose.msra.mxu0 %v262
      %962 = vmatpush.xpose.msra.mxu0 %v261
      %963 = vmatpush.xpose.msra.mxu0 %v260
      %964 = vmatpush.xpose.msra.mxu0 %v259
      %965 = vmatpush.xpose.msra.mxu0 %v258
      %966 = vmatpush.xpose.msra.mxu0 %v257
      %967 = vmatpush.xpose.msra.mxu0 %v256
      %968 = vmatpush.xpose.msra.mxu0 %v255
      %969 = vmatmul.f32.gmra.mxu0 %v732
      %v970 = vpop.f32.mrf.mxu0
      %v971 = vadd.f32 0.0, %v970
      %972 = vdwg.mxu0
      %973 = vmatpush.xpose.msra.mxu0 %v286
      %974 = vmatpush.xpose.msra.mxu0 %v285
      %975 = vmatpush.xpose.msra.mxu0 %v284
      %976 = vmatpush.xpose.msra.mxu0 %v283
      %977 = vmatpush.xpose.msra.mxu0 %v282
      %978 = vmatpush.xpose.msra.mxu0 %v281
      %979 = vmatpush.xpose.msra.mxu0 %v280
      %980 = vmatpush.xpose.msra.mxu0 %v279
      %981 = vmatpush.xpose.msra.mxu0 %v278
      %982 = vmatpush.xpose.msra.mxu0 %v277
      %983 = vmatpush.xpose.msra.mxu0 %v276
      %984 = vmatpush.xpose.msra.mxu0 %v275
      %985 = vmatpush.xpose.msra.mxu0 %v274
      %986 = vmatpush.xpose.msra.mxu0 %v273
      %987 = vmatpush.xpose.msra.mxu0 %v272
      %988 = vmatpush.xpose.msra.mxu0 %v271
      %989 = vmatmul.f32.gmra.mxu0 %v732
      %v990 = vpop.f32.mrf.mxu0
      %v991 = vadd.f32 0.0, %v990
      %992 = vdwg.mxu0
      %993 = vmatpush.xpose.msra.mxu0 %v302
      %994 = vmatpush.xpose.msra.mxu0 %v301
      %995 = vmatpush.xpose.msra.mxu0 %v300
      %996 = vmatpush.xpose.msra.mxu0 %v299
      %997 = vmatpush.xpose.msra.mxu0 %v298
      %998 = vmatpush.xpose.msra.mxu0 %v297
      %999 = vmatpush.xpose.msra.mxu0 %v296
      %1000 = vmatpush.xpose.msra.mxu0 %v295
      %1001 = vmatpush.xpose.msra.mxu0 %v294
      %1002 = vmatpush.xpose.msra.mxu0 %v293
      %1003 = vmatpush.xpose.msra.mxu0 %v292
      %1004 = vmatpush.xpose.msra.mxu0 %v291
      %1005 = vmatpush.xpose.msra.mxu0 %v290
      %1006 = vmatpush.xpose.msra.mxu0 %v289
      %1007 = vmatpush.xpose.msra.mxu0 %v288
      %1008 = vmatpush.xpose.msra.mxu0 %v287
      %1009 = vmatmul.f32.gmra.mxu0 %v732
      %v1010 = vpop.f32.mrf.mxu0
      %v1011 = vadd.f32 0.0, %v1010
      %1012 = vdwg.mxu0
      %1013 = vmatpush.xpose.msra.mxu0 %v318
      %1014 = vmatpush.xpose.msra.mxu0 %v317
      %1015 = vmatpush.xpose.msra.mxu0 %v316
      %1016 = vmatpush.xpose.msra.mxu0 %v315
      %1017 = vmatpush.xpose.msra.mxu0 %v314
      %1018 = vmatpush.xpose.msra.mxu0 %v313
      %1019 = vmatpush.xpose.msra.mxu0 %v312
      %1020 = vmatpush.xpose.msra.mxu0 %v311
      %1021 = vmatpush.xpose.msra.mxu0 %v310
      %1022 = vmatpush.xpose.msra.mxu0 %v309
      %1023 = vmatpush.xpose.msra.mxu0 %v308
      %1024 = vmatpush.xpose.msra.mxu0 %v307
      %1025 = vmatpush.xpose.msra.mxu0 %v306
      %1026 = vmatpush.xpose.msra.mxu0 %v305
      %1027 = vmatpush.xpose.msra.mxu0 %v304
      %1028 = vmatpush.xpose.msra.mxu0 %v303
      %1029 = vmatmul.f32.gmra.mxu0 %v732
      %v1030 = vpop.f32.mrf.mxu0
      %v1031 = vadd.f32 0.0, %v1030
      %1032 = vdwg.mxu0
      %1033 = vmatpush.xpose.msra.mxu0 %v334
      %1034 = vmatpush.xpose.msra.mxu0 %v333
      %1035 = vmatpush.xpose.msra.mxu0 %v332
      %1036 = vmatpush.xpose.msra.mxu0 %v331
      %1037 = vmatpush.xpose.msra.mxu0 %v330
      %1038 = vmatpush.xpose.msra.mxu0 %v329
      %1039 = vmatpush.xpose.msra.mxu0 %v328
      %1040 = vmatpush.xpose.msra.mxu0 %v327
      %1041 = vmatpush.xpose.msra.mxu0 %v326
      %1042 = vmatpush.xpose.msra.mxu0 %v325
      %1043 = vmatpush.xpose.msra.mxu0 %v324
      %1044 = vmatpush.xpose.msra.mxu0 %v323
      %1045 = vmatpush.xpose.msra.mxu0 %v322
      %1046 = vmatpush.xpose.msra.mxu0 %v321
      %1047 = vmatpush.xpose.msra.mxu0 %v320
      %1048 = vmatpush.xpose.msra.mxu0 %v319
      %1049 = vmatmul.f32.gmra.mxu0 %v732
      %v1050 = vpop.f32.mrf.mxu0
      %v1051 = vadd.f32 0.0, %v1050
      %1052 = vdwg.mxu0
      %v1053 = vmul.f32 %v751, %v751
      %v1054 = vmul.f32 %v771, %v771
      %v1055 = vmul.f32 %v791, %v791
      %v1056 = vmul.f32 %v811, %v811
      %v1057 = vmul.f32 %v831, %v831
      %v1058 = vmul.f32 %v851, %v851
      %v1059 = vmul.f32 %v871, %v871
      %v1060 = vmul.f32 %v891, %v891
      %v1061 = vmul.f32 %v911, %v911
      %v1062 = vmul.f32 %v931, %v931
      %v1063 = vmul.f32 %v951, %v951
      %v1064 = vmul.f32 %v971, %v971
      %v1065 = vmul.f32 %v991, %v991
      %v1066 = vmul.f32 %v1011, %v1011
      %v1067 = vmul.f32 %v1031, %v1031
      %v1068 = vmul.f32 %v1051, %v1051
      %v1069 = vsel %vm692, %v1053, 0.0
      %v1070 = vsel %vm692, %v1054, 0.0
      %v1071 = vadd.f32 %v1069, %v1070
      %v1072 = vsel %vm692, %v1055, 0.0
      %v1073 = vadd.f32 %v1071, %v1072
      %v1074 = vsel %vm692, %v1056, 0.0
      %v1075 = vadd.f32 %v1073, %v1074
      %v1076 = vsel %vm692, %v1057, 0.0
      %v1077 = vadd.f32 %v1075, %v1076
      %v1078 = vsel %vm692, %v1058, 0.0
      %v1079 = vadd.f32 %v1077, %v1078
      %v1080 = vsel %vm692, %v1059, 0.0
      %v1081 = vadd.f32 %v1079, %v1080
      %v1082 = vsel %vm692, %v1060, 0.0
      %v1083 = vadd.f32 %v1081, %v1082
      %v1084 = vsel %vm692, %v1061, 0.0
      %v1085 = vadd.f32 %v1083, %v1084
      %v1086 = vsel %vm692, %v1062, 0.0
      %v1087 = vadd.f32 %v1085, %v1086
      %v1088 = vsel %vm692, %v1063, 0.0
      %v1089 = vadd.f32 %v1087, %v1088
      %v1090 = vsel %vm692, %v1064, 0.0
      %v1091 = vadd.f32 %v1089, %v1090
      %v1092 = vsel %vm692, %v1065, 0.0
      %v1093 = vadd.f32 %v1091, %v1092
      %v1094 = vsel %vm692, %v1066, 0.0
      %v1095 = vadd.f32 %v1093, %v1094
      %v1096 = vsel %vm692, %v1067, 0.0
      %v1097 = vadd.f32 %v1095, %v1096
      %v1098 = vsel %vm692, %v1068, 0.0
      %v1099 = vadd.f32 %v1097, %v1098
      %1100 = vadd.xlane.f32.xlu0 %v1099
      %v1101 = vpop.xlane.xlu0 %1100
      %v1102 = vrot.slane %v1101, 4
      %v1103 = vadd.f32 %v1101, %v1102
      %v1104 = vrot.slane %v1103, 2
      %v1105 = vadd.f32 %v1103, %v1104
      %v1106 = vrot.slane %v1105, 1
      %v1107 = vadd.f32 %v1105, %v1106
      %s1108 = vtos %v1107
      %v1109 = vstv %s1108
      %v1110 = vrsqrt.pop %v1109
      %v1111 = vmul.f32 %v1110, %v1109
      %v1112 = vmul.f32 %v1111, %v1110
      %v1113 = vmul.f32 0.5, %v1112
      %v1114 = vsub.f32 1.5, %v1113
      %v1115 = vmul.f32 %v1110, %v1114
      %v1116 = vmul.f32 %v1109, %v1115
      %vm1117 = vcmp.eq.f32.partialorder %v1109, inf
      %v1118 = vsel %vm1117, %v1109, %v1116
      %vm1119 = vcmp.eq.f32.partialorder %v1109, 0.0
      %v1120 = vand.u32 %v1109, 2147483648
      %v1121 = vsel %vm1119, %v1120, %v1118
      %v1122 = vadd.f32 %v1121, 0.0001
      %v1123 = vrcp.pop %v1122
      %v1124 = vmul.f32 %v1122, %v1123
      %v1125 = vsub.f32 1.0, %v1124
      %v1126 = vmul.f32 %v1123, %v1125
      %v1127 = vadd.f32 %v1123, %v1126
      %vm1128 = vweird.f32 %v1122
      %vm1129 = vweird.f32 %v1123
      %vm1130 = vmor %vm1128, %vm1129
      %v1131 = vsel %vm1130, %v1123, %v1127
      %v1132 = vand.u32 2147483647, %v1122
      %vm1133 = vcmp.eq.f32.partialorder %v1132, 8.507059e+37
      %v1134 = vand.u32 %v1122, 2147483648
      %v1135 = vor.u32 1.1754944e-38, %v1134
      %v1136 = vsel %vm1133, %v1135, %v1131
      %v1137 = vmul.f32 1.0, %v1136
      %v1138 = vmul.f32 %v751, %v1137
      %v1139 = vmul.f32 %v771, %v1137
      %v1140 = vmul.f32 %v791, %v1137
      %v1141 = vmul.f32 %v811, %v1137
      %v1142 = vmul.f32 %v831, %v1137
      %v1143 = vmul.f32 %v851, %v1137
      %v1144 = vmul.f32 %v871, %v1137
      %v1145 = vmul.f32 %v891, %v1137
      %v1146 = vmul.f32 %v911, %v1137
      %v1147 = vmul.f32 %v931, %v1137
      %v1148 = vmul.f32 %v951, %v1137
      %v1149 = vmul.f32 %v971, %v1137
      %v1150 = vmul.f32 %v991, %v1137
      %v1151 = vmul.f32 %v1011, %v1137
      %v1152 = vmul.f32 %v1031, %v1137
      %v1153 = vmul.f32 %v1051, %v1137
      %v1154 = vmul.f32 %v1138, %v751
      %v1155 = vmul.f32 %v1139, %v771
      %v1156 = vmul.f32 %v1140, %v791
      %v1157 = vmul.f32 %v1141, %v811
      %v1158 = vmul.f32 %v1142, %v831
      %v1159 = vmul.f32 %v1143, %v851
      %v1160 = vmul.f32 %v1144, %v871
      %v1161 = vmul.f32 %v1145, %v891
      %v1162 = vmul.f32 %v1146, %v911
      %v1163 = vmul.f32 %v1147, %v931
      %v1164 = vmul.f32 %v1148, %v951
      %v1165 = vmul.f32 %v1149, %v971
      %v1166 = vmul.f32 %v1150, %v991
      %v1167 = vmul.f32 %v1151, %v1011
      %v1168 = vmul.f32 %v1152, %v1031
      %v1169 = vmul.f32 %v1153, %v1051
      %v1170 = vsel %vm692, %v1154, 0.0
      %v1171 = vsel %vm692, %v1155, 0.0
      %v1172 = vadd.f32 %v1170, %v1171
      %v1173 = vsel %vm692, %v1156, 0.0
      %v1174 = vadd.f32 %v1172, %v1173
      %v1175 = vsel %vm692, %v1157, 0.0
      %v1176 = vadd.f32 %v1174, %v1175
      %v1177 = vsel %vm692, %v1158, 0.0
      %v1178 = vadd.f32 %v1176, %v1177
      %v1179 = vsel %vm692, %v1159, 0.0
      %v1180 = vadd.f32 %v1178, %v1179
      %v1181 = vsel %vm692, %v1160, 0.0
      %v1182 = vadd.f32 %v1180, %v1181
      %v1183 = vsel %vm692, %v1161, 0.0
      %v1184 = vadd.f32 %v1182, %v1183
      %v1185 = vsel %vm692, %v1162, 0.0
      %v1186 = vadd.f32 %v1184, %v1185
      %v1187 = vsel %vm692, %v1163, 0.0
      %v1188 = vadd.f32 %v1186, %v1187
      %v1189 = vsel %vm692, %v1164, 0.0
      %v1190 = vadd.f32 %v1188, %v1189
      %v1191 = vsel %vm692, %v1165, 0.0
      %v1192 = vadd.f32 %v1190, %v1191
      %v1193 = vsel %vm692, %v1166, 0.0
      %v1194 = vadd.f32 %v1192, %v1193
      %v1195 = vsel %vm692, %v1167, 0.0
      %v1196 = vadd.f32 %v1194, %v1195
      %v1197 = vsel %vm692, %v1168, 0.0
      %v1198 = vadd.f32 %v1196, %v1197
      %v1199 = vsel %vm692, %v1169, 0.0
      %v1200 = vadd.f32 %v1198, %v1199
      %1201 = vadd.xlane.f32.xlu0 %v1200
      %v1202 = vpop.xlane.xlu0 %1201
      %v1203 = vrot.slane %v1202, 4
      %v1204 = vadd.f32 %v1202, %v1203
      %v1205 = vrot.slane %v1204, 2
      %v1206 = vadd.f32 %v1204, %v1205
      %v1207 = vrot.slane %v1206, 1
      %v1208 = vadd.f32 %v1206, %v1207
      %s1209 = vtos %v1208
      %v1210 = vstv %s1209
      %v1211 = vrcp.pop %v1210
      %v1212 = vmul.f32 %v1210, %v1211
      %v1213 = vsub.f32 1.0, %v1212
      %v1214 = vmul.f32 %v1211, %v1213
      %v1215 = vadd.f32 %v1211, %v1214
      %vm1216 = vweird.f32 %v1210
      %vm1217 = vweird.f32 %v1211
      %vm1218 = vmor %vm1216, %vm1217
      %v1219 = vsel %vm1218, %v1211, %v1215
      %v1220 = vand.u32 2147483647, %v1210
      %vm1221 = vcmp.eq.f32.partialorder %v1220, 8.507059e+37
      %v1222 = vand.u32 %v1210, 2147483648
      %v1223 = vor.u32 1.1754944e-38, %v1222
      %v1224 = vsel %vm1221, %v1223, %v1219
      %v1225 = vmul.f32 1.0, %v1224
      %vm1226 = vcmask 0
      %1227 = vst.msk [vmem:[#allocation2] sm:$0x1] %vm1226, %v1225
    $region37: #{tpu_custom_call.1} parent=1 // pred_fallthru
      _
    %v1228 = vld [vmem:[#allocation3] sm:$0xff]
    %v1229 = vld [vmem:[#allocation6] sm:$0xff]
    %v1230 = vld [vmem:[#allocation6 + $0x8] sm:$0xff]
    %v1231 = vld [vmem:[#allocation6 + $0x10] sm:$0xff]
    %v1232 = vld [vmem:[#allocation6 + $0x18] sm:$0xff]
    %v1233 = vld [vmem:[#allocation6 + $0x20] sm:$0xff]
    %v1234 = vld [vmem:[#allocation6 + $0x28] sm:$0xff]
    %v1235 = vld [vmem:[#allocation6 + $0x30] sm:$0xff]
    %v1236 = vld [vmem:[#allocation6 + $0x38] sm:$0xff]
    %v1237 = vld [vmem:[#allocation6 + $0x40] sm:$0xff]
    %v1238 = vld [vmem:[#allocation6 + $0x48] sm:$0xff]
    %v1239 = vld [vmem:[#allocation6 + $0x50] sm:$0xff]
    %v1240 = vld [vmem:[#allocation6 + $0x58] sm:$0xff]
    %v1241 = vld [vmem:[#allocation6 + $0x60] sm:$0xff]
    %v1242 = vld [vmem:[#allocation6 + $0x68] sm:$0xff]
    %v1243 = vld [vmem:[#allocation6 + $0x70] sm:$0xff]
    %v1244 = vld [vmem:[#allocation6 + $0x78] sm:$0xff]
    %v1245 = vld [vmem:[#allocation6 + $0x80] sm:$0xff]
    %v1246 = vld [vmem:[#allocation6 + $0x88] sm:$0xff]
    %v1247 = vld [vmem:[#allocation6 + $0x90] sm:$0xff]
    %v1248 = vld [vmem:[#allocation6 + $0x98] sm:$0xff]
    %v1249 = vld [vmem:[#allocation6 + $0xa0] sm:$0xff]
    %v1250 = vld [vmem:[#allocation6 + $0xa8] sm:$0xff]
    %v1251 = vld [vmem:[#allocation6 + $0xb0] sm:$0xff]
    %v1252 = vld [vmem:[#allocation6 + $0xb8] sm:$0xff]
    %v1253 = vld [vmem:[#allocation6 + $0xc0] sm:$0xff]
    %v1254 = vld [vmem:[#allocation6 + $0xc8] sm:$0xff]
    %v1255 = vld [vmem:[#allocation6 + $0xd0] sm:$0xff]
    %v1256 = vld [vmem:[#allocation6 + $0xd8] sm:$0xff]
    %v1257 = vld [vmem:[#allocation6 + $0xe0] sm:$0xff]
    %v1258 = vld [vmem:[#allocation6 + $0xe8] sm:$0xff]
    %v1259 = vld [vmem:[#allocation6 + $0xf0] sm:$0xff]
    %v1260 = vld [vmem:[#allocation6 + $0xf8] sm:$0xff]
    %v1261 = vld [vmem:[#allocation6 + $0x100] sm:$0xff]
    %v1262 = vld [vmem:[#allocation6 + $0x108] sm:$0xff]
    %v1263 = vld [vmem:[#allocation6 + $0x110] sm:$0xff]
    %v1264 = vld [vmem:[#allocation6 + $0x118] sm:$0xff]
    %v1265 = vld [vmem:[#allocation6 + $0x120] sm:$0xff]
    %v1266 = vld [vmem:[#allocation6 + $0x128] sm:$0xff]
    %v1267 = vld [vmem:[#allocation6 + $0x130] sm:$0xff]
    %v1268 = vld [vmem:[#allocation6 + $0x138] sm:$0xff]
    %v1269 = vld [vmem:[#allocation6 + $0x140] sm:$0xff]
    %v1270 = vld [vmem:[#allocation6 + $0x148] sm:$0xff]
    %v1271 = vld [vmem:[#allocation6 + $0x150] sm:$0xff]
    %v1272 = vld [vmem:[#allocation6 + $0x158] sm:$0xff]
    %v1273 = vld [vmem:[#allocation6 + $0x160] sm:$0xff]
    %v1274 = vld [vmem:[#allocation6 + $0x168] sm:$0xff]
    %v1275 = vld [vmem:[#allocation6 + $0x170] sm:$0xff]
    %v1276 = vld [vmem:[#allocation6 + $0x178] sm:$0xff]
    %v1277 = vld [vmem:[#allocation6 + $0x180] sm:$0xff]
    %v1278 = vld [vmem:[#allocation6 + $0x188] sm:$0xff]
    %v1279 = vld [vmem:[#allocation6 + $0x190] sm:$0xff]
    %v1280 = vld [vmem:[#allocation6 + $0x198] sm:$0xff]
    %v1281 = vld [vmem:[#allocation6 + $0x1a0] sm:$0xff]
    %v1282 = vld [vmem:[#allocation6 + $0x1a8] sm:$0xff]
    %v1283 = vld [vmem:[#allocation6 + $0x1b0] sm:$0xff]
    %v1284 = vld [vmem:[#allocation6 + $0x1b8] sm:$0xff]
    %v1285 = vld [vmem:[#allocation6 + $0x1c0] sm:$0xff]
    %v1286 = vld [vmem:[#allocation6 + $0x1c8] sm:$0xff]
    %v1287 = vld [vmem:[#allocation6 + $0x1d0] sm:$0xff]
    %v1288 = vld [vmem:[#allocation6 + $0x1d8] sm:$0xff]
    %v1289 = vld [vmem:[#allocation6 + $0x1e0] sm:$0xff]
    %v1290 = vld [vmem:[#allocation6 + $0x1e8] sm:$0xff]
    %v1291 = vld [vmem:[#allocation6 + $0x1f0] sm:$0xff]
    %v1292 = vld [vmem:[#allocation6 + $0x1f8] sm:$0xff]
    %v1293 = vld [vmem:[#allocation6 + $0x200] sm:$0xff]
    %v1294 = vld [vmem:[#allocation6 + $0x208] sm:$0xff]
    %v1295 = vld [vmem:[#allocation6 + $0x210] sm:$0xff]
    %v1296 = vld [vmem:[#allocation6 + $0x218] sm:$0xff]
    %v1297 = vld [vmem:[#allocation6 + $0x220] sm:$0xff]
    %v1298 = vld [vmem:[#allocation6 + $0x228] sm:$0xff]
    %v1299 = vld [vmem:[#allocation6 + $0x230] sm:$0xff]
    %v1300 = vld [vmem:[#allocation6 + $0x238] sm:$0xff]
    %v1301 = vld [vmem:[#allocation6 + $0x240] sm:$0xff]
    %v1302 = vld [vmem:[#allocation6 + $0x248] sm:$0xff]
    %v1303 = vld [vmem:[#allocation6 + $0x250] sm:$0xff]
    %v1304 = vld [vmem:[#allocation6 + $0x258] sm:$0xff]
    %v1305 = vld [vmem:[#allocation6 + $0x260] sm:$0xff]
    %v1306 = vld [vmem:[#allocation6 + $0x268] sm:$0xff]
    %v1307 = vld [vmem:[#allocation6 + $0x270] sm:$0xff]
    %v1308 = vld [vmem:[#allocation6 + $0x278] sm:$0xff]
    %v1309 = vld [vmem:[#allocation6 + $0x280] sm:$0xff]
    %v1310 = vld [vmem:[#allocation6 + $0x288] sm:$0xff]
    %v1311 = vld [vmem:[#allocation6 + $0x290] sm:$0xff]
    %v1312 = vld [vmem:[#allocation6 + $0x298] sm:$0xff]
    %v1313 = vld [vmem:[#allocation6 + $0x2a0] sm:$0xff]
    %v1314 = vld [vmem:[#allocation6 + $0x2a8] sm:$0xff]
    %v1315 = vld [vmem:[#allocation6 + $0x2b0] sm:$0xff]
    %v1316 = vld [vmem:[#allocation6 + $0x2b8] sm:$0xff]
    %v1317 = vld [vmem:[#allocation6 + $0x2c0] sm:$0xff]
    %v1318 = vld [vmem:[#allocation6 + $0x2c8] sm:$0xff]
    %v1319 = vld [vmem:[#allocation6 + $0x2d0] sm:$0xff]
    %v1320 = vld [vmem:[#allocation6 + $0x2d8] sm:$0xff]
    %v1321 = vld [vmem:[#allocation6 + $0x2e0] sm:$0xff]
    %v1322 = vld [vmem:[#allocation6 + $0x2e8] sm:$0xff]
    %v1323 = vld [vmem:[#allocation6 + $0x2f0] sm:$0xff]
    %v1324 = vld [vmem:[#allocation6 + $0x2f8] sm:$0xff]
    %v1325 = vld [vmem:[#allocation6 + $0x300] sm:$0xff]
    %v1326 = vld [vmem:[#allocation6 + $0x308] sm:$0xff]
    %v1327 = vld [vmem:[#allocation6 + $0x310] sm:$0xff]
    %v1328 = vld [vmem:[#allocation6 + $0x318] sm:$0xff]
    %v1329 = vld [vmem:[#allocation6 + $0x320] sm:$0xff]
    %v1330 = vld [vmem:[#allocation6 + $0x328] sm:$0xff]
    %v1331 = vld [vmem:[#allocation6 + $0x330] sm:$0xff]
    %v1332 = vld [vmem:[#allocation6 + $0x338] sm:$0xff]
    %v1333 = vld [vmem:[#allocation6 + $0x340] sm:$0xff]
    %v1334 = vld [vmem:[#allocation6 + $0x348] sm:$0xff]
    %v1335 = vld [vmem:[#allocation6 + $0x350] sm:$0xff]
    %v1336 = vld [vmem:[#allocation6 + $0x358] sm:$0xff]
    %v1337 = vld [vmem:[#allocation6 + $0x360] sm:$0xff]
    %v1338 = vld [vmem:[#allocation6 + $0x368] sm:$0xff]
    %v1339 = vld [vmem:[#allocation6 + $0x370] sm:$0xff]
    %v1340 = vld [vmem:[#allocation6 + $0x378] sm:$0xff]
    %v1341 = vld [vmem:[#allocation6 + $0x380] sm:$0xff]
    %v1342 = vld [vmem:[#allocation6 + $0x388] sm:$0xff]
    %v1343 = vld [vmem:[#allocation6 + $0x390] sm:$0xff]
    %v1344 = vld [vmem:[#allocation6 + $0x398] sm:$0xff]
    %v1345 = vld [vmem:[#allocation6 + $0x3a0] sm:$0xff]
    %v1346 = vld [vmem:[#allocation6 + $0x3a8] sm:$0xff]
    %v1347 = vld [vmem:[#allocation6 + $0x3b0] sm:$0xff]
    %v1348 = vld [vmem:[#allocation6 + $0x3b8] sm:$0xff]
    %v1349 = vld [vmem:[#allocation6 + $0x3c0] sm:$0xff]
    %v1350 = vld [vmem:[#allocation6 + $0x3c8] sm:$0xff]
    %v1351 = vld [vmem:[#allocation6 + $0x3d0] sm:$0xff]
    %v1352 = vld [vmem:[#allocation6 + $0x3d8] sm:$0xff]
    %v1353 = vld [vmem:[#allocation6 + $0x3e0] sm:$0xff]
    %v1354 = vld [vmem:[#allocation6 + $0x3e8] sm:$0xff]
    %v1355 = vld [vmem:[#allocation6 + $0x3f0] sm:$0xff]
    %v1356 = vld [vmem:[#allocation6 + $0x3f8] sm:$0xff]
    %v1357 = vld [vmem:[#allocation6 + $0x400] sm:$0xff]
    %v1358 = vld [vmem:[#allocation6 + $0x408] sm:$0xff]
    %v1359 = vld [vmem:[#allocation6 + $0x410] sm:$0xff]
    %v1360 = vld [vmem:[#allocation6 + $0x418] sm:$0xff]
    %v1361 = vld [vmem:[#allocation6 + $0x420] sm:$0xff]
    %v1362 = vld [vmem:[#allocation6 + $0x428] sm:$0xff]
    %v1363 = vld [vmem:[#allocation6 + $0x430] sm:$0xff]
    %v1364 = vld [vmem:[#allocation6 + $0x438] sm:$0xff]
    %v1365 = vld [vmem:[#allocation6 + $0x440] sm:$0xff]
    %v1366 = vld [vmem:[#allocation6 + $0x448] sm:$0xff]
    %v1367 = vld [vmem:[#allocation6 + $0x450] sm:$0xff]
    %v1368 = vld [vmem:[#allocation6 + $0x458] sm:$0xff]
    %v1369 = vld [vmem:[#allocation6 + $0x460] sm:$0xff]
    %v1370 = vld [vmem:[#allocation6 + $0x468] sm:$0xff]
    %v1371 = vld [vmem:[#allocation6 + $0x470] sm:$0xff]
    %v1372 = vld [vmem:[#allocation6 + $0x478] sm:$0xff]
    %v1373 = vld [vmem:[#allocation6 + $0x480] sm:$0xff]
    %v1374 = vld [vmem:[#allocation6 + $0x488] sm:$0xff]
    %v1375 = vld [vmem:[#allocation6 + $0x490] sm:$0xff]
    %v1376 = vld [vmem:[#allocation6 + $0x498] sm:$0xff]
    %v1377 = vld [vmem:[#allocation6 + $0x4a0] sm:$0xff]
    %v1378 = vld [vmem:[#allocation6 + $0x4a8] sm:$0xff]
    %v1379 = vld [vmem:[#allocation6 + $0x4b0] sm:$0xff]
    %v1380 = vld [vmem:[#allocation6 + $0x4b8] sm:$0xff]
    %v1381 = vld [vmem:[#allocation6 + $0x4c0] sm:$0xff]
    %v1382 = vld [vmem:[#allocation6 + $0x4c8] sm:$0xff]
    %v1383 = vld [vmem:[#allocation6 + $0x4d0] sm:$0xff]
    %v1384 = vld [vmem:[#allocation6 + $0x4d8] sm:$0xff]
    %v1385 = vld [vmem:[#allocation6 + $0x4e0] sm:$0xff]
    %v1386 = vld [vmem:[#allocation6 + $0x4e8] sm:$0xff]
    %v1387 = vld [vmem:[#allocation6 + $0x4f0] sm:$0xff]
    %v1388 = vld [vmem:[#allocation6 + $0x4f8] sm:$0xff]
    %v1389 = vld [vmem:[#allocation6 + $0x500] sm:$0xff]
    %v1390 = vld [vmem:[#allocation6 + $0x508] sm:$0xff]
    %v1391 = vld [vmem:[#allocation6 + $0x510] sm:$0xff]
    %v1392 = vld [vmem:[#allocation6 + $0x518] sm:$0xff]
    %v1393 = vld [vmem:[#allocation6 + $0x520] sm:$0xff]
    %v1394 = vld [vmem:[#allocation6 + $0x528] sm:$0xff]
    %v1395 = vld [vmem:[#allocation6 + $0x530] sm:$0xff]
    %v1396 = vld [vmem:[#allocation6 + $0x538] sm:$0xff]
    %v1397 = vld [vmem:[#allocation6 + $0x540] sm:$0xff]
    %v1398 = vld [vmem:[#allocation6 + $0x548] sm:$0xff]
    %v1399 = vld [vmem:[#allocation6 + $0x550] sm:$0xff]
    %v1400 = vld [vmem:[#allocation6 + $0x558] sm:$0xff]
    %v1401 = vld [vmem:[#allocation6 + $0x560] sm:$0xff]
    %v1402 = vld [vmem:[#allocation6 + $0x568] sm:$0xff]
    %v1403 = vld [vmem:[#allocation6 + $0x570] sm:$0xff]
    %v1404 = vld [vmem:[#allocation6 + $0x578] sm:$0xff]
    %v1405 = vld [vmem:[#allocation6 + $0x580] sm:$0xff]
    %v1406 = vld [vmem:[#allocation6 + $0x588] sm:$0xff]
    %v1407 = vld [vmem:[#allocation6 + $0x590] sm:$0xff]
    %v1408 = vld [vmem:[#allocation6 + $0x598] sm:$0xff]
    %v1409 = vld [vmem:[#allocation6 + $0x5a0] sm:$0xff]
    %v1410 = vld [vmem:[#allocation6 + $0x5a8] sm:$0xff]
    %v1411 = vld [vmem:[#allocation6 + $0x5b0] sm:$0xff]
    %v1412 = vld [vmem:[#allocation6 + $0x5b8] sm:$0xff]
    %v1413 = vld [vmem:[#allocation6 + $0x5c0] sm:$0xff]
    %v1414 = vld [vmem:[#allocation6 + $0x5c8] sm:$0xff]
    %v1415 = vld [vmem:[#allocation6 + $0x5d0] sm:$0xff]
    %v1416 = vld [vmem:[#allocation6 + $0x5d8] sm:$0xff]
    %v1417 = vld [vmem:[#allocation6 + $0x5e0] sm:$0xff]
    %v1418 = vld [vmem:[#allocation6 + $0x5e8] sm:$0xff]
    %v1419 = vld [vmem:[#allocation6 + $0x5f0] sm:$0xff]
    %v1420 = vld [vmem:[#allocation6 + $0x5f8] sm:$0xff]
    %v1421 = vld [vmem:[#allocation6 + $0x600] sm:$0xff]
    %v1422 = vld [vmem:[#allocation6 + $0x608] sm:$0xff]
    %v1423 = vld [vmem:[#allocation6 + $0x610] sm:$0xff]
    %v1424 = vld [vmem:[#allocation6 + $0x618] sm:$0xff]
    %v1425 = vld [vmem:[#allocation6 + $0x620] sm:$0xff]
    %v1426 = vld [vmem:[#allocation6 + $0x628] sm:$0xff]
    %v1427 = vld [vmem:[#allocation6 + $0x630] sm:$0xff]
    %v1428 = vld [vmem:[#allocation6 + $0x638] sm:$0xff]
    %v1429 = vld [vmem:[#allocation6 + $0x640] sm:$0xff]
    %v1430 = vld [vmem:[#allocation6 + $0x648] sm:$0xff]
    %v1431 = vld [vmem:[#allocation6 + $0x650] sm:$0xff]
    %v1432 = vld [vmem:[#allocation6 + $0x658] sm:$0xff]
    %v1433 = vld [vmem:[#allocation6 + $0x660] sm:$0xff]
    %v1434 = vld [vmem:[#allocation6 + $0x668] sm:$0xff]
    %v1435 = vld [vmem:[#allocation6 + $0x670] sm:$0xff]
    %v1436 = vld [vmem:[#allocation6 + $0x678] sm:$0xff]
    %v1437 = vld [vmem:[#allocation6 + $0x680] sm:$0xff]
    %v1438 = vld [vmem:[#allocation6 + $0x688] sm:$0xff]
    %v1439 = vld [vmem:[#allocation6 + $0x690] sm:$0xff]
    %v1440 = vld [vmem:[#allocation6 + $0x698] sm:$0xff]
    %v1441 = vld [vmem:[#allocation6 + $0x6a0] sm:$0xff]
    %v1442 = vld [vmem:[#allocation6 + $0x6a8] sm:$0xff]
    %v1443 = vld [vmem:[#allocation6 + $0x6b0] sm:$0xff]
    %v1444 = vld [vmem:[#allocation6 + $0x6b8] sm:$0xff]
    %v1445 = vld [vmem:[#allocation6 + $0x6c0] sm:$0xff]
    %v1446 = vld [vmem:[#allocation6 + $0x6c8] sm:$0xff]
    %v1447 = vld [vmem:[#allocation6 + $0x6d0] sm:$0xff]
    %v1448 = vld [vmem:[#allocation6 + $0x6d8] sm:$0xff]
    %v1449 = vld [vmem:[#allocation6 + $0x6e0] sm:$0xff]
    %v1450 = vld [vmem:[#allocation6 + $0x6e8] sm:$0xff]
    %v1451 = vld [vmem:[#allocation6 + $0x6f0] sm:$0xff]
    %v1452 = vld [vmem:[#allocation6 + $0x6f8] sm:$0xff]
    %v1453 = vld [vmem:[#allocation6 + $0x700] sm:$0xff]
    %v1454 = vld [vmem:[#allocation6 + $0x708] sm:$0xff]
    %v1455 = vld [vmem:[#allocation6 + $0x710] sm:$0xff]
    %v1456 = vld [vmem:[#allocation6 + $0x718] sm:$0xff]
    %v1457 = vld [vmem:[#allocation6 + $0x720] sm:$0xff]
    %v1458 = vld [vmem:[#allocation6 + $0x728] sm:$0xff]
    %v1459 = vld [vmem:[#allocation6 + $0x730] sm:$0xff]
    %v1460 = vld [vmem:[#allocation6 + $0x738] sm:$0xff]
    %v1461 = vld [vmem:[#allocation6 + $0x740] sm:$0xff]
    %v1462 = vld [vmem:[#allocation6 + $0x748] sm:$0xff]
    %v1463 = vld [vmem:[#allocation6 + $0x750] sm:$0xff]
    %v1464 = vld [vmem:[#allocation6 + $0x758] sm:$0xff]
    %v1465 = vld [vmem:[#allocation6 + $0x760] sm:$0xff]
    %v1466 = vld [vmem:[#allocation6 + $0x768] sm:$0xff]
    %v1467 = vld [vmem:[#allocation6 + $0x770] sm:$0xff]
    %v1468 = vld [vmem:[#allocation6 + $0x778] sm:$0xff]
    %v1469 = vld [vmem:[#allocation6 + $0x780] sm:$0xff]
    %v1470 = vld [vmem:[#allocation6 + $0x788] sm:$0xff]
    %v1471 = vld [vmem:[#allocation6 + $0x790] sm:$0xff]
    %v1472 = vld [vmem:[#allocation6 + $0x798] sm:$0xff]
    %v1473 = vld [vmem:[#allocation6 + $0x7a0] sm:$0xff]
    %v1474 = vld [vmem:[#allocation6 + $0x7a8] sm:$0xff]
    %v1475 = vld [vmem:[#allocation6 + $0x7b0] sm:$0xff]
    %v1476 = vld [vmem:[#allocation6 + $0x7b8] sm:$0xff]
    %v1477 = vld [vmem:[#allocation6 + $0x7c0] sm:$0xff]
    %v1478 = vld [vmem:[#allocation6 + $0x7c8] sm:$0xff]
    %v1479 = vld [vmem:[#allocation6 + $0x7d0] sm:$0xff]
    %v1480 = vld [vmem:[#allocation6 + $0x7d8] sm:$0xff]
    %v1481 = vld [vmem:[#allocation6 + $0x7e0] sm:$0xff]
    %v1482 = vld [vmem:[#allocation6 + $0x7e8] sm:$0xff]
    %v1483 = vld [vmem:[#allocation6 + $0x7f0] sm:$0xff]
    %v1484 = vld [vmem:[#allocation6 + $0x7f8] sm:$0xff]
    %1485 = vmatpush.xpose.msra.mxu0 %v1244
    %1486 = vmatpush.xpose.msra.mxu0 %v1243
    %1487 = vmatpush.xpose.msra.mxu0 %v1242
    %1488 = vmatpush.xpose.msra.mxu0 %v1241
    %1489 = vmatpush.xpose.msra.mxu0 %v1240
    %1490 = vmatpush.xpose.msra.mxu0 %v1239
    %1491 = vmatpush.xpose.msra.mxu0 %v1238
    %1492 = vmatpush.xpose.msra.mxu0 %v1237
    %1493 = vmatpush.xpose.msra.mxu0 %v1236
    %1494 = vmatpush.xpose.msra.mxu0 %v1235
    %1495 = vmatpush.xpose.msra.mxu0 %v1234
    %1496 = vmatpush.xpose.msra.mxu0 %v1233
    %1497 = vmatpush.xpose.msra.mxu0 %v1232
    %1498 = vmatpush.xpose.msra.mxu0 %v1231
    %1499 = vmatpush.xpose.msra.mxu0 %v1230
    %1500 = vmatpush.xpose.msra.mxu0 %v1229
    %1501 = vmatmul.f32.gmra.mxu0 %v1228
    %v1502 = vpop.f32.mrf.mxu0
    %v1503 = vadd.f32 0.0, %v1502
    %1504 = vdwg.mxu0
    %1505 = vmatpush.xpose.msra.mxu0 %v1260
    %1506 = vmatpush.xpose.msra.mxu0 %v1259
    %1507 = vmatpush.xpose.msra.mxu0 %v1258
    %1508 = vmatpush.xpose.msra.mxu0 %v1257
    %1509 = vmatpush.xpose.msra.mxu0 %v1256
    %1510 = vmatpush.xpose.msra.mxu0 %v1255
    %1511 = vmatpush.xpose.msra.mxu0 %v1254
    %1512 = vmatpush.xpose.msra.mxu0 %v1253
    %1513 = vmatpush.xpose.msra.mxu0 %v1252
    %1514 = vmatpush.xpose.msra.mxu0 %v1251
    %1515 = vmatpush.xpose.msra.mxu0 %v1250
    %1516 = vmatpush.xpose.msra.mxu0 %v1249
    %1517 = vmatpush.xpose.msra.mxu0 %v1248
    %1518 = vmatpush.xpose.msra.mxu0 %v1247
    %1519 = vmatpush.xpose.msra.mxu0 %v1246
    %1520 = vmatpush.xpose.msra.mxu0 %v1245
    %1521 = vmatmul.f32.gmra.mxu0 %v1228
    %v1522 = vpop.f32.mrf.mxu0
    %v1523 = vadd.f32 0.0, %v1522
    %1524 = vdwg.mxu0
    %1525 = vmatpush.xpose.msra.mxu0 %v1276
    %1526 = vmatpush.xpose.msra.mxu0 %v1275
    %1527 = vmatpush.xpose.msra.mxu0 %v1274
    %1528 = vmatpush.xpose.msra.mxu0 %v1273
    %1529 = vmatpush.xpose.msra.mxu0 %v1272
    %1530 = vmatpush.xpose.msra.mxu0 %v1271
    %1531 = vmatpush.xpose.msra.mxu0 %v1270
    %1532 = vmatpush.xpose.msra.mxu0 %v1269
    %1533 = vmatpush.xpose.msra.mxu0 %v1268
    %1534 = vmatpush.xpose.msra.mxu0 %v1267
    %1535 = vmatpush.xpose.msra.mxu0 %v1266
    %1536 = vmatpush.xpose.msra.mxu0 %v1265
    %1537 = vmatpush.xpose.msra.mxu0 %v1264
    %1538 = vmatpush.xpose.msra.mxu0 %v1263
    %1539 = vmatpush.xpose.msra.mxu0 %v1262
    %1540 = vmatpush.xpose.msra.mxu0 %v1261
    %1541 = vmatmul.f32.gmra.mxu0 %v1228
    %v1542 = vpop.f32.mrf.mxu0
    %v1543 = vadd.f32 0.0, %v1542
    %1544 = vdwg.mxu0
    %1545 = vmatpush.xpose.msra.mxu0 %v1292
    %1546 = vmatpush.xpose.msra.mxu0 %v1291
    %1547 = vmatpush.xpose.msra.mxu0 %v1290
    %1548 = vmatpush.xpose.msra.mxu0 %v1289
    %1549 = vmatpush.xpose.msra.mxu0 %v1288
    %1550 = vmatpush.xpose.msra.mxu0 %v1287
    %1551 = vmatpush.xpose.msra.mxu0 %v1286
    %1552 = vmatpush.xpose.msra.mxu0 %v1285
    %1553 = vmatpush.xpose.msra.mxu0 %v1284
    %1554 = vmatpush.xpose.msra.mxu0 %v1283
    %1555 = vmatpush.xpose.msra.mxu0 %v1282
    %1556 = vmatpush.xpose.msra.mxu0 %v1281
    %1557 = vmatpush.xpose.msra.mxu0 %v1280
    %1558 = vmatpush.xpose.msra.mxu0 %v1279
    %1559 = vmatpush.xpose.msra.mxu0 %v1278
    %1560 = vmatpush.xpose.msra.mxu0 %v1277
    %1561 = vmatmul.f32.gmra.mxu0 %v1228
    %v1562 = vpop.f32.mrf.mxu0
    %v1563 = vadd.f32 0.0, %v1562
    %1564 = vdwg.mxu0
    %1565 = vmatpush.xpose.msra.mxu0 %v1308
    %1566 = vmatpush.xpose.msra.mxu0 %v1307
    %1567 = vmatpush.xpose.msra.mxu0 %v1306
    %1568 = vmatpush.xpose.msra.mxu0 %v1305
    %1569 = vmatpush.xpose.msra.mxu0 %v1304
    %1570 = vmatpush.xpose.msra.mxu0 %v1303
    %1571 = vmatpush.xpose.msra.mxu0 %v1302
    %1572 = vmatpush.xpose.msra.mxu0 %v1301
    %1573 = vmatpush.xpose.msra.mxu0 %v1300
    %1574 = vmatpush.xpose.msra.mxu0 %v1299
    %1575 = vmatpush.xpose.msra.mxu0 %v1298
    %1576 = vmatpush.xpose.msra.mxu0 %v1297
    %1577 = vmatpush.xpose.msra.mxu0 %v1296
    %1578 = vmatpush.xpose.msra.mxu0 %v1295
    %1579 = vmatpush.xpose.msra.mxu0 %v1294
    %1580 = vmatpush.xpose.msra.mxu0 %v1293
    %1581 = vmatmul.f32.gmra.mxu0 %v1228
    %v1582 = vpop.f32.mrf.mxu0
    %v1583 = vadd.f32 0.0, %v1582
    %1584 = vdwg.mxu0
    %1585 = vmatpush.xpose.msra.mxu0 %v1324
    %1586 = vmatpush.xpose.msra.mxu0 %v1323
    %1587 = vmatpush.xpose.msra.mxu0 %v1322
    %1588 = vmatpush.xpose.msra.mxu0 %v1321
    %1589 = vmatpush.xpose.msra.mxu0 %v1320
    %1590 = vmatpush.xpose.msra.mxu0 %v1319
    %1591 = vmatpush.xpose.msra.mxu0 %v1318
    %1592 = vmatpush.xpose.msra.mxu0 %v1317
    %1593 = vmatpush.xpose.msra.mxu0 %v1316
    %1594 = vmatpush.xpose.msra.mxu0 %v1315
    %1595 = vmatpush.xpose.msra.mxu0 %v1314
    %1596 = vmatpush.xpose.msra.mxu0 %v1313
    %1597 = vmatpush.xpose.msra.mxu0 %v1312
    %1598 = vmatpush.xpose.msra.mxu0 %v1311
    %1599 = vmatpush.xpose.msra.mxu0 %v1310
    %1600 = vmatpush.xpose.msra.mxu0 %v1309
    %1601 = vmatmul.f32.gmra.mxu0 %v1228
    %v1602 = vpop.f32.mrf.mxu0
    %v1603 = vadd.f32 0.0, %v1602
    %1604 = vdwg.mxu0
    %1605 = vmatpush.xpose.msra.mxu0 %v1340
    %1606 = vmatpush.xpose.msra.mxu0 %v1339
    %1607 = vmatpush.xpose.msra.mxu0 %v1338
    %1608 = vmatpush.xpose.msra.mxu0 %v1337
    %1609 = vmatpush.xpose.msra.mxu0 %v1336
    %1610 = vmatpush.xpose.msra.mxu0 %v1335
    %1611 = vmatpush.xpose.msra.mxu0 %v1334
    %1612 = vmatpush.xpose.msra.mxu0 %v1333
    %1613 = vmatpush.xpose.msra.mxu0 %v1332
    %1614 = vmatpush.xpose.msra.mxu0 %v1331
    %1615 = vmatpush.xpose.msra.mxu0 %v1330
    %1616 = vmatpush.xpose.msra.mxu0 %v1329
    %1617 = vmatpush.xpose.msra.mxu0 %v1328
    %1618 = vmatpush.xpose.msra.mxu0 %v1327
    %1619 = vmatpush.xpose.msra.mxu0 %v1326
    %1620 = vmatpush.xpose.msra.mxu0 %v1325
    %1621 = vmatmul.f32.gmra.mxu0 %v1228
    %v1622 = vpop.f32.mrf.mxu0
    %v1623 = vadd.f32 0.0, %v1622
    %1624 = vdwg.mxu0
    %1625 = vmatpush.xpose.msra.mxu0 %v1356
    %1626 = vmatpush.xpose.msra.mxu0 %v1355
    %1627 = vmatpush.xpose.msra.mxu0 %v1354
    %1628 = vmatpush.xpose.msra.mxu0 %v1353
    %1629 = vmatpush.xpose.msra.mxu0 %v1352
    %1630 = vmatpush.xpose.msra.mxu0 %v1351
    %1631 = vmatpush.xpose.msra.mxu0 %v1350
    %1632 = vmatpush.xpose.msra.mxu0 %v1349
    %1633 = vmatpush.xpose.msra.mxu0 %v1348
    %1634 = vmatpush.xpose.msra.mxu0 %v1347
    %1635 = vmatpush.xpose.msra.mxu0 %v1346
    %1636 = vmatpush.xpose.msra.mxu0 %v1345
    %1637 = vmatpush.xpose.msra.mxu0 %v1344
    %1638 = vmatpush.xpose.msra.mxu0 %v1343
    %1639 = vmatpush.xpose.msra.mxu0 %v1342
    %1640 = vmatpush.xpose.msra.mxu0 %v1341
    %1641 = vmatmul.f32.gmra.mxu0 %v1228
    %v1642 = vpop.f32.mrf.mxu0
    %v1643 = vadd.f32 0.0, %v1642
    %1644 = vdwg.mxu0
    %1645 = vmatpush.xpose.msra.mxu0 %v1372
    %1646 = vmatpush.xpose.msra.mxu0 %v1371
    %1647 = vmatpush.xpose.msra.mxu0 %v1370
    %1648 = vmatpush.xpose.msra.mxu0 %v1369
    %1649 = vmatpush.xpose.msra.mxu0 %v1368
    %1650 = vmatpush.xpose.msra.mxu0 %v1367
    %1651 = vmatpush.xpose.msra.mxu0 %v1366
    %1652 = vmatpush.xpose.msra.mxu0 %v1365
    %1653 = vmatpush.xpose.msra.mxu0 %v1364
    %1654 = vmatpush.xpose.msra.mxu0 %v1363
    %1655 = vmatpush.xpose.msra.mxu0 %v1362
    %1656 = vmatpush.xpose.msra.mxu0 %v1361
    %1657 = vmatpush.xpose.msra.mxu0 %v1360
    %1658 = vmatpush.xpose.msra.mxu0 %v1359
    %1659 = vmatpush.xpose.msra.mxu0 %v1358
    %1660 = vmatpush.xpose.msra.mxu0 %v1357
    %1661 = vmatmul.f32.gmra.mxu0 %v1228
    %v1662 = vpop.f32.mrf.mxu0
    %v1663 = vadd.f32 0.0, %v1662
    %1664 = vdwg.mxu0
    %1665 = vmatpush.xpose.msra.mxu0 %v1388
    %1666 = vmatpush.xpose.msra.mxu0 %v1387
    %1667 = vmatpush.xpose.msra.mxu0 %v1386
    %1668 = vmatpush.xpose.msra.mxu0 %v1385
    %1669 = vmatpush.xpose.msra.mxu0 %v1384
    %1670 = vmatpush.xpose.msra.mxu0 %v1383
    %1671 = vmatpush.xpose.msra.mxu0 %v1382
    %1672 = vmatpush.xpose.msra.mxu0 %v1381
    %1673 = vmatpush.xpose.msra.mxu0 %v1380
    %1674 = vmatpush.xpose.msra.mxu0 %v1379
    %1675 = vmatpush.xpose.msra.mxu0 %v1378
    %1676 = vmatpush.xpose.msra.mxu0 %v1377
    %1677 = vmatpush.xpose.msra.mxu0 %v1376
    %1678 = vmatpush.xpose.msra.mxu0 %v1375
    %1679 = vmatpush.xpose.msra.mxu0 %v1374
    %1680 = vmatpush.xpose.msra.mxu0 %v1373
    %1681 = vmatmul.f32.gmra.mxu0 %v1228
    %v1682 = vpop.f32.mrf.mxu0
    %v1683 = vadd.f32 0.0, %v1682
    %1684 = vdwg.mxu0
    %1685 = vmatpush.xpose.msra.mxu0 %v1404
    %1686 = vmatpush.xpose.msra.mxu0 %v1403
    %1687 = vmatpush.xpose.msra.mxu0 %v1402
    %1688 = vmatpush.xpose.msra.mxu0 %v1401
    %1689 = vmatpush.xpose.msra.mxu0 %v1400
    %1690 = vmatpush.xpose.msra.mxu0 %v1399
    %1691 = vmatpush.xpose.msra.mxu0 %v1398
    %1692 = vmatpush.xpose.msra.mxu0 %v1397
    %1693 = vmatpush.xpose.msra.mxu0 %v1396
    %1694 = vmatpush.xpose.msra.mxu0 %v1395
    %1695 = vmatpush.xpose.msra.mxu0 %v1394
    %1696 = vmatpush.xpose.msra.mxu0 %v1393
    %1697 = vmatpush.xpose.msra.mxu0 %v1392
    %1698 = vmatpush.xpose.msra.mxu0 %v1391
    %1699 = vmatpush.xpose.msra.mxu0 %v1390
    %1700 = vmatpush.xpose.msra.mxu0 %v1389
    %1701 = vmatmul.f32.gmra.mxu0 %v1228
    %v1702 = vpop.f32.mrf.mxu0
    %v1703 = vadd.f32 0.0, %v1702
    %1704 = vdwg.mxu0
    %1705 = vmatpush.xpose.msra.mxu0 %v1420
    %1706 = vmatpush.xpose.msra.mxu0 %v1419
    %1707 = vmatpush.xpose.msra.mxu0 %v1418
    %1708 = vmatpush.xpose.msra.mxu0 %v1417
    %1709 = vmatpush.xpose.msra.mxu0 %v1416
    %1710 = vmatpush.xpose.msra.mxu0 %v1415
    %1711 = vmatpush.xpose.msra.mxu0 %v1414
    %1712 = vmatpush.xpose.msra.mxu0 %v1413
    %1713 = vmatpush.xpose.msra.mxu0 %v1412
    %1714 = vmatpush.xpose.msra.mxu0 %v1411
    %1715 = vmatpush.xpose.msra.mxu0 %v1410
    %1716 = vmatpush.xpose.msra.mxu0 %v1409
    %1717 = vmatpush.xpose.msra.mxu0 %v1408
    %1718 = vmatpush.xpose.msra.mxu0 %v1407
    %1719 = vmatpush.xpose.msra.mxu0 %v1406
    %1720 = vmatpush.xpose.msra.mxu0 %v1405
    %1721 = vmatmul.f32.gmra.mxu0 %v1228
    %v1722 = vpop.f32.mrf.mxu0
    %v1723 = vadd.f32 0.0, %v1722
    %1724 = vdwg.mxu0
    %1725 = vmatpush.xpose.msra.mxu0 %v1436
    %1726 = vmatpush.xpose.msra.mxu0 %v1435
    %1727 = vmatpush.xpose.msra.mxu0 %v1434
    %1728 = vmatpush.xpose.msra.mxu0 %v1433
    %1729 = vmatpush.xpose.msra.mxu0 %v1432
    %1730 = vmatpush.xpose.msra.mxu0 %v1431
    %1731 = vmatpush.xpose.msra.mxu0 %v1430
    %1732 = vmatpush.xpose.msra.mxu0 %v1429
    %1733 = vmatpush.xpose.msra.mxu0 %v1428
    %1734 = vmatpush.xpose.msra.mxu0 %v1427
    %1735 = vmatpush.xpose.msra.mxu0 %v1426
    %1736 = vmatpush.xpose.msra.mxu0 %v1425
    %1737 = vmatpush.xpose.msra.mxu0 %v1424
    %1738 = vmatpush.xpose.msra.mxu0 %v1423
    %1739 = vmatpush.xpose.msra.mxu0 %v1422
    %1740 = vmatpush.xpose.msra.mxu0 %v1421
    %1741 = vmatmul.f32.gmra.mxu0 %v1228
    %v1742 = vpop.f32.mrf.mxu0
    %v1743 = vadd.f32 0.0, %v1742
    %1744 = vdwg.mxu0
    %1745 = vmatpush.xpose.msra.mxu0 %v1452
    %1746 = vmatpush.xpose.msra.mxu0 %v1451
    %1747 = vmatpush.xpose.msra.mxu0 %v1450
    %1748 = vmatpush.xpose.msra.mxu0 %v1449
    %1749 = vmatpush.xpose.msra.mxu0 %v1448
    %1750 = vmatpush.xpose.msra.mxu0 %v1447
    %1751 = vmatpush.xpose.msra.mxu0 %v1446
    %1752 = vmatpush.xpose.msra.mxu0 %v1445
    %1753 = vmatpush.xpose.msra.mxu0 %v1444
    %1754 = vmatpush.xpose.msra.mxu0 %v1443
    %1755 = vmatpush.xpose.msra.mxu0 %v1442
    %1756 = vmatpush.xpose.msra.mxu0 %v1441
    %1757 = vmatpush.xpose.msra.mxu0 %v1440
    %1758 = vmatpush.xpose.msra.mxu0 %v1439
    %1759 = vmatpush.xpose.msra.mxu0 %v1438
    %1760 = vmatpush.xpose.msra.mxu0 %v1437
    %1761 = vmatmul.f32.gmra.mxu0 %v1228
    %v1762 = vpop.f32.mrf.mxu0
    %v1763 = vadd.f32 0.0, %v1762
    %1764 = vdwg.mxu0
    %1765 = vmatpush.xpose.msra.mxu0 %v1468
    %1766 = vmatpush.xpose.msra.mxu0 %v1467
    %1767 = vmatpush.xpose.msra.mxu0 %v1466
    %1768 = vmatpush.xpose.msra.mxu0 %v1465
    %1769 = vmatpush.xpose.msra.mxu0 %v1464
    %1770 = vmatpush.xpose.msra.mxu0 %v1463
    %1771 = vmatpush.xpose.msra.mxu0 %v1462
    %1772 = vmatpush.xpose.msra.mxu0 %v1461
    %1773 = vmatpush.xpose.msra.mxu0 %v1460
    %1774 = vmatpush.xpose.msra.mxu0 %v1459
    %1775 = vmatpush.xpose.msra.mxu0 %v1458
    %1776 = vmatpush.xpose.msra.mxu0 %v1457
    %1777 = vmatpush.xpose.msra.mxu0 %v1456
    %1778 = vmatpush.xpose.msra.mxu0 %v1455
    %1779 = vmatpush.xpose.msra.mxu0 %v1454
    %1780 = vmatpush.xpose.msra.mxu0 %v1453
    %1781 = vmatmul.f32.gmra.mxu0 %v1228
    %v1782 = vpop.f32.mrf.mxu0
    %v1783 = vadd.f32 0.0, %v1782
    %1784 = vdwg.mxu0
    %1785 = vmatpush.xpose.msra.mxu0 %v1484
    %1786 = vmatpush.xpose.msra.mxu0 %v1483
    %1787 = vmatpush.xpose.msra.mxu0 %v1482
    %1788 = vmatpush.xpose.msra.mxu0 %v1481
    %1789 = vmatpush.xpose.msra.mxu0 %v1480
    %1790 = vmatpush.xpose.msra.mxu0 %v1479
    %1791 = vmatpush.xpose.msra.mxu0 %v1478
    %1792 = vmatpush.xpose.msra.mxu0 %v1477
    %1793 = vmatpush.xpose.msra.mxu0 %v1476
    %1794 = vmatpush.xpose.msra.mxu0 %v1475
    %1795 = vmatpush.xpose.msra.mxu0 %v1474
    %1796 = vmatpush.xpose.msra.mxu0 %v1473
    %1797 = vmatpush.xpose.msra.mxu0 %v1472
    %1798 = vmatpush.xpose.msra.mxu0 %v1471
    %1799 = vmatpush.xpose.msra.mxu0 %v1470
    %1800 = vmatpush.xpose.msra.mxu0 %v1469
    %1801 = vmatmul.f32.gmra.mxu0 %v1228
    %v1802 = vpop.f32.mrf.mxu0
    %v1803 = vadd.f32 0.0, %v1802
    %1804 = vdwg.mxu0
    %v1805 = vld [vmem:[#allocation2] sm:$0x1]
    %v1807 = vperm.slane %v1805, 0
    %1808 = vset.pattern.permute.xlu0 0
    %1809 = vperm.xlu0 %1808, %v1807
    %v1810 = vpop.permute.xlu0 %1809
    %v1812 = vmul.f32 %v1503, %v1810
    %v1813 = vmul.f32 %v1523, %v1810
    %v1814 = vmul.f32 %v1543, %v1810
    %v1815 = vmul.f32 %v1563, %v1810
    %v1816 = vmul.f32 %v1583, %v1810
    %v1817 = vmul.f32 %v1603, %v1810
    %v1818 = vmul.f32 %v1623, %v1810
    %v1819 = vmul.f32 %v1643, %v1810
    %v1820 = vmul.f32 %v1663, %v1810
    %v1821 = vmul.f32 %v1683, %v1810
    %v1822 = vmul.f32 %v1703, %v1810
    %v1823 = vmul.f32 %v1723, %v1810
    %v1824 = vmul.f32 %v1743, %v1810
    %v1825 = vmul.f32 %v1763, %v1810
    %v1826 = vmul.f32 %v1783, %v1810
    %v1827 = vmul.f32 %v1803, %v1810
    %v1828 = vld [vmem:[#allocation8] sm:$0xff]
    %v1829 = vld [vmem:[#allocation8 + $0x8] sm:$0xff]
    %v1832 = vperm.slane %v1828, 0
    %v1833 = vperm.slane %v1828, 1
    %v1834 = vperm.slane %v1828, 2
    %v1835 = vperm.slane %v1828, 3
    %v1836 = vperm.slane %v1828, 4
    %v1837 = vperm.slane %v1828, 5
    %v1838 = vperm.slane %v1828, 6
    %v1839 = vperm.slane %v1828, 7
    %v1840 = vperm.slane %v1829, 0
    %v1841 = vperm.slane %v1829, 1
    %v1842 = vperm.slane %v1829, 2
    %v1843 = vperm.slane %v1829, 3
    %v1844 = vperm.slane %v1829, 4
    %v1845 = vperm.slane %v1829, 5
    %v1846 = vperm.slane %v1829, 6
    %v1847 = vperm.slane %v1829, 7
    %v1864 = vadd.f32 %v1812, %v1832
    %v1865 = vadd.f32 %v1813, %v1833
    %v1866 = vadd.f32 %v1814, %v1834
    %v1867 = vadd.f32 %v1815, %v1835
    %v1868 = vadd.f32 %v1816, %v1836
    %v1869 = vadd.f32 %v1817, %v1837
    %v1870 = vadd.f32 %v1818, %v1838
    %v1871 = vadd.f32 %v1819, %v1839
    %v1872 = vadd.f32 %v1820, %v1840
    %v1873 = vadd.f32 %v1821, %v1841
    %v1874 = vadd.f32 %v1822, %v1842
    %v1875 = vadd.f32 %v1823, %v1843
    %v1876 = vadd.f32 %v1824, %v1844
    %v1877 = vadd.f32 %v1825, %v1845
    %v1878 = vadd.f32 %v1826, %v1846
    %v1879 = vadd.f32 %v1827, %v1847
    %1880 = vst [vmem:[#allocation11] sm:$0xff] %v1864
    %1881 = vst [vmem:[#allocation11 + $0x8] sm:$0xff] %v1865
    %1882 = vst [vmem:[#allocation11 + $0x10] sm:$0xff] %v1866
    %1883 = vst [vmem:[#allocation11 + $0x18] sm:$0xff] %v1867
    %1884 = vst [vmem:[#allocation11 + $0x20] sm:$0xff] %v1868
    %1885 = vst [vmem:[#allocation11 + $0x28] sm:$0xff] %v1869
    %1886 = vst [vmem:[#allocation11 + $0x30] sm:$0xff] %v1870
    %1887 = vst [vmem:[#allocation11 + $0x38] sm:$0xff] %v1871
    %1888 = vst [vmem:[#allocation11 + $0x40] sm:$0xff] %v1872
    %1889 = vst [vmem:[#allocation11 + $0x48] sm:$0xff] %v1873
    %1890 = vst [vmem:[#allocation11 + $0x50] sm:$0xff] %v1874
    %1891 = vst [vmem:[#allocation11 + $0x58] sm:$0xff] %v1875
    %1892 = vst [vmem:[#allocation11 + $0x60] sm:$0xff] %v1876
    %1893 = vst [vmem:[#allocation11 + $0x68] sm:$0xff] %v1877
    %1894 = vst [vmem:[#allocation11 + $0x70] sm:$0xff] %v1878
    %1895 = vst [vmem:[#allocation11 + $0x78] sm:$0xff] %v1879
    // Predicated region
    $region38: #{tpu_custom_call.1} parent=1 // pred_check
      _
    $region39: #{tpu_custom_call.1} parent=1 // pred_check_branch
      %1897 = sbr.rel (0) target = $region41
    $region40: #{tpu_custom_call.1} parent=1 // pred_region
      %1899 = vsyncadd [#allocation5], 0
      %s1901 = sshll.u32 [#allocation11], 4
      %s1902 = int_to_ptr.vmem [resolvable:$true] %s1901
      %s1903 = sshll.u32 %s4, 4
      %s1904 = int_to_ptr.hbm [resolvable:$true] %s1903
      %1906 = dma.vmem_to_hbm [thread:$0]  %s1902, 2048, %s1904, [#allocation5]
    $region41: #{tpu_custom_call.1} parent=1 // pred_fallthru
      _
    // Predicated region
    $region42: #{tpu_custom_call.1} parent=1 // pred_check
      _
    $region43: #{tpu_custom_call.1} parent=1 // pred_check_branch
      %1908 = sbr.rel (0) target = $region45
    $region44: #{tpu_custom_call.1} parent=1 // pred_region
      %1910 = dma.done [#allocation5], 2048
    $region45: #{tpu_custom_call.1} parent=1 // pred_fallthru
      _
    %1911 = vsyncpa [#allocation4], 1
    %1912 = vsyncpa [#allocation7], 1
    %1913 = vsyncpa [#allocation10], 1
    %1914 = vsyncpa [#allocation5], 1

</llo_original>
